<compile_context>
chip_gen: v6e
topology: v6e:2x2x1
jax: 0.10.0
libtpu: 0.0.40
codegen_flags: <defaults>
</compile_context>

<pallas_src>
import functools
import math

import jax
import jax.numpy as jnp
from jax.experimental import pallas as pl
from jax.experimental.pallas import tpu as pltpu

LN_EPS = 1e-6


def _layernorm(x, g, b):
    mu = jnp.mean(x, axis=-1, keepdims=True)
    var = jnp.mean((x - mu) ** 2, axis=-1, keepdims=True)
    return (x - mu) * jax.lax.rsqrt(var + LN_EPS) * g + b


def _gelu(x):
    # TODO(synk): PyTorch F.gelu default is the exact erf form; tanh approximation used here.
    return jax.nn.gelu(x, approximate=True)


# ----------------------------------------------------------------------------
# Fused kernel: patch-embed (+pos) -> depth x (attn + mlp + adapter) -> head.
# grid = (batch_tiles, depth).  acc_ref (VMEM scratch) carries the (mb*S, D)
# activation across the (sequential) depth axis.
#
# Packed vector rows (vec_ref, per block, shape (8, D)):
#   0: ln1_g  1: ln1_b  2: b_proj  3: ls1
#   4: ln2_g  5: ln2_b  6: b_fc2   7: ls2
# ----------------------------------------------------------------------------
def fused_vit_kernel(
    xp_ref, wpatch_ref, bpatch_ref, pos_ref,
    vec_ref, bqkv_ref, bfc1_ref,
    wqkv_ref, wproj_ref, wfc1_ref, wfc2_ref,
    wdown_ref, bdown_ref, wup_ref, bup_ref,
    normg_ref, normb_ref, whead_ref, bhead_ref,
    o_ref,
    acc_ref,
    *, num_heads, mb, seq,
):
    l = pl.program_id(1)                       # depth axis (inner, sequential)
    D = acc_ref.shape[-1]
    M = mb * seq
    hd = D // num_heads
    scale = hd ** -0.5

    # ---- patch embedding + pos embed (first depth step of each batch tile) ----
    @pl.when(l == 0)
    def _():
        pe = (
            jnp.dot(xp_ref[...], wpatch_ref[...], preferred_element_type=jnp.float32)
            + bpatch_ref[...]
        )
        acc_ref[...] = (pe.reshape(mb, seq, D) + pos_ref[...][None, :, :]).reshape(M, D)

    x = acc_ref[...]                           # (M, D) f32, resident across depth

    vec = vec_ref[0]                           # (8, D)
    ln1g, ln1b = vec[0:1], vec[1:2]
    bproj, ls1 = vec[2:3], vec[3:4]
    ln2g, ln2b = vec[4:5], vec[5:6]
    bfc2, ls2 = vec[6:7], vec[7:8]

    # ---- attention branch:  x = x + ls1 * attn(norm1(x)) ----
    xn = _layernorm(x, ln1g, ln1b).astype(jnp.bfloat16)
    qkv = (
        jnp.dot(xn, wqkv_ref[0], preferred_element_type=jnp.float32)
        + bqkv_ref[0]
    )                                          # (M, 3D) f32
    q = ((qkv[:, :D] * scale).reshape(mb, seq, D)).astype(jnp.bfloat16)   # scale folded into q
    k = (qkv[:, D:2 * D].reshape(mb, seq, D)).astype(jnp.bfloat16)
    v = (qkv[:, 2 * D:].reshape(mb, seq, D)).astype(jnp.bfloat16)

    # TODO(synk): at production head counts, batch the score/value einsums over
    # heads ('bhqd,bhkd->bhqk') instead of this unrolled loop once the layout
    # supports it cleanly; the loop below is known to lower and num_heads is small.
    head_outs = []
    for h in range(num_heads):
        sl = slice(h * hd, (h + 1) * hd)
        s = jnp.einsum("bqd,bkd->bqk", q[..., sl], k[..., sl],
                       preferred_element_type=jnp.float32)
        s = s - jnp.max(s, axis=-1, keepdims=True)
        p = jnp.exp(s)
        p = p * pl.reciprocal(jnp.sum(p, axis=-1, keepdims=True), approx=True)
        head_outs.append(
            jnp.einsum("bqk,bkd->bqd", p.astype(jnp.bfloat16), v[..., sl],
                       preferred_element_type=jnp.float32))
    # one full-K (M,D)@(D,D) output projection keeps the MXU fed
    attn = jnp.concatenate(head_outs, axis=-1).reshape(M, D).astype(jnp.bfloat16)
    attn_out = jnp.dot(attn, wproj_ref[0], preferred_element_type=jnp.float32) + bproj
    x = x + ls1 * attn_out

    h_res = x

    # ---- MLP branch:  y = ls2 * mlp(norm2(x)) ----
    xn2 = _layernorm(x, ln2g, ln2b).astype(jnp.bfloat16)
    m = jnp.dot(xn2, wfc1_ref[0], preferred_element_type=jnp.float32) + bfc1_ref[0]
    m = _gelu(m).astype(jnp.bfloat16)
    m = jnp.dot(m, wfc2_ref[0], preferred_element_type=jnp.float32) + bfc2
    y = ls2 * m

    # ---- shared adapter:  y = up(gelu(down(y))) + y ----
    a = jnp.dot(y.astype(jnp.bfloat16), wdown_ref[...],
                preferred_element_type=jnp.float32) + bdown_ref[...]
    a = _gelu(a).astype(jnp.bfloat16)
    a = jnp.dot(a, wup_ref[...], preferred_element_type=jnp.float32) + bup_ref[...]
    y = a + y

    x_new = y + h_res
    acc_ref[...] = x_new

    # ---- final norm -> mean pool over tokens -> classification head ----
    @pl.when(l == pl.num_programs(1) - 1)
    def _():
        xf = _layernorm(x_new, normg_ref[...], normb_ref[...])        # (M, D)
        pooled = jnp.mean(xf.reshape(mb, seq, D), axis=1)             # (mb, D)
        o_ref[...] = (
            jnp.dot(pooled, whead_ref[...], preferred_element_type=jnp.float32)
            + bhead_ref[...]
        )


# ----------------------------------------------------------------------------
# Wrapper
# ----------------------------------------------------------------------------
_VEC_KEYS = ("ln1_g", "ln1_b", "b_proj", "ls1", "ln2_g", "ln2_b", "b_fc2", "ls2")


def _const_spec(a):
    # Grid-invariant: same block index every step -> never re-DMA'd.
    # TODO(synk): pipeline_mode=pl.Buffered(1) here would halve the VMEM
    # reservation of invariant blocks (matters most on v7x's 64 MiB VMEM).
    nd = a.ndim
    return pl.BlockSpec(a.shape, lambda b, l, n=nd: (0,) * n)


def _stacked_spec(a):
    # (depth, ...) array: select this depth step's weight slab.
    nd = a.ndim - 1
    return pl.BlockSpec((1,) + a.shape[1:], lambda b, l, n=nd: (l,) + (0,) * n)


def adapter_vit_forward(x_nchw, params, *, batch_tile=None):
    B, C, H, W = x_nchw.shape
    p = params["patch_size"]
    D = params["embed_dim"]
    nh = params["num_heads"]
    nPh, nPw = H // p, W // p
    S = nPh * nPw            # keep S a multiple of 8 so (M,D)<->(mb,S,D) reshapes are tile-aligned
    # batch tiling: one tile at demo sizes; at production sizes pick
    # batch_tile = B // 2 so the "parallel" axis splits across v7x's 2 TCs.
    mb = B if batch_tile is None else batch_tile
    assert B % mb == 0
    n_btiles = B // mb
    Mt = mb * S

    # patch extraction (glue): (B,C,H,W) -> (B*nP, C*p*p), flatten order (C,kh,kw)
    xp = (
        x_nchw.reshape(B, C, nPh, p, nPw, p)
        .transpose(0, 2, 4, 1, 3, 5)
        .reshape(B * S, C * p * p)
    )
    pos = params["pos_embed"].reshape(S, D)    # added inside the kernel; no B-broadcast in HBM

    blocks = params["blocks"]
    depth = len(blocks)

    def stack(key, dtype):
        return jnp.stack([blk[key] for blk in blocks], axis=0).astype(dtype)

    # pack the small (1, D) per-block vectors into one (depth, 8, D) array
    vecs = jnp.stack(
        [jnp.concatenate([blk[k] for k in _VEC_KEYS], axis=0) for blk in blocks],
        axis=0,
    )
    b_qkv = stack("b_qkv", jnp.float32)        # (depth, 1, 3D)
    b_fc1 = stack("b_fc1", jnp.float32)        # (depth, 1, hidden)
    # bf16 weight slabs: halve per-depth DMA + double-buffered VMEM, native MXU rate
    w_qkv = stack("w_qkv", jnp.bfloat16)       # (depth, D, 3D)
    w_proj = stack("w_proj", jnp.bfloat16)     # (depth, D, D)
    w_fc1 = stack("w_fc1", jnp.bfloat16)       # (depth, D, hidden)
    w_fc2 = stack("w_fc2", jnp.bfloat16)       # (depth, hidden, D)

    # single adapter module shared by every block (as in Adapter_ViT) -> grid-invariant
    w_down = params["w_down"].astype(jnp.bfloat16)
    b_down = params["b_down"]
    w_up = params["w_up"].astype(jnp.bfloat16)
    b_up = params["b_up"]

    nc = params["w_head"].shape[1]

    in_arrays = [
        xp, params["w_patch"], params["b_patch"], pos,
        vecs, b_qkv, b_fc1,
        w_qkv, w_proj, w_fc1, w_fc2,
        w_down, b_down, w_up, b_up,
        params["norm_g"], params["norm_b"], params["w_head"], params["b_head"],
    ]
    in_specs = [
        pl.BlockSpec((Mt, xp.shape[1]), lambda b, l: (b, 0)),
        _const_spec(params["w_patch"]), _const_spec(params["b_patch"]),
        _const_spec(pos),
        _stacked_spec(vecs), _stacked_spec(b_qkv), _stacked_spec(b_fc1),
        _stacked_spec(w_qkv), _stacked_spec(w_proj),
        _stacked_spec(w_fc1), _stacked_spec(w_fc2),
        _const_spec(w_down), _const_spec(b_down),
        _const_spec(w_up), _const_spec(b_up),
        _const_spec(params["norm_g"]), _const_spec(params["norm_b"]),
        _const_spec(params["w_head"]), _const_spec(params["b_head"]),
    ]

    # --- scoped-VMEM budget from the actual resident set ---
    resident = 0
    for a, spec in zip(in_arrays, in_specs):
        resident += 2 * math.prod(spec.block_shape) * a.dtype.itemsize   # double-buffered
    resident += 2 * mb * nc * 4                                          # output block
    scratch_bytes = Mt * D * 4                                           # acc scratch
    hidden = w_fc1.shape[-1]
    temp_bytes = 4 * Mt * max(3 * D, hidden) * 4 + nh * mb * S * S * 4   # qkv/mlp/scores temporaries
    vmem_limit = max(32 << 20,
                     min(int(1.25 * (resident + scratch_bytes + temp_bytes)), 100 << 20))
    # TODO(synk): on v7x (64 MiB VMEM) at ViT-B sizes, additionally slab-loop
    # the (M, 3D)/(M, hidden) temporaries over rows of acc_ref if spills appear.

    kernel = functools.partial(fused_vit_kernel, num_heads=nh, mb=mb, seq=S)
    return pl.pallas_call(
        kernel,
        grid_spec=pltpu.PrefetchScalarGridSpec(
            num_scalar_prefetch=0,
            grid=(n_btiles, depth),
            in_specs=in_specs,
            out_specs=pl.BlockSpec((mb, nc), lambda b, l: (b, 0)),
            scratch_shapes=[pltpu.VMEM((Mt, D), jnp.float32)],
        ),
        out_shape=jax.ShapeDtypeStruct((B, nc), jnp.float32),
        compiler_params=pltpu.CompilerParams(
            dimension_semantics=("parallel", "arbitrary"),   # depth carries the activation
            vmem_limit_bytes=vmem_limit,
        ),
    )(*in_arrays)


# ----------------------------------------------------------------------------
# Deterministic parameter construction (synthetic basic_model + adapter/head)
# ----------------------------------------------------------------------------
def make_params(key, *, embed_dim=32, patch_size=4, in_chans=3, img_size=16,
                depth=2, num_heads=2, mlp_ratio=4, reduction_factor=8,
                num_classes=10, adapter_init="zeros"):
    nP = (img_size // patch_size) ** 2
    hidden = embed_dim * mlp_ratio
    adim = embed_dim // reduction_factor

    def nrm(k, shape, scale=0.02):
        return (scale * jax.random.normal(k, shape)).astype(jnp.float32)

    keys = iter(jax.random.split(key, 64))
    params = {
        "embed_dim": embed_dim,
        "patch_size": patch_size,
        "num_heads": num_heads,
        "w_patch": nrm(next(keys), (in_chans * patch_size * patch_size, embed_dim)),
        "b_patch": jnp.zeros((1, embed_dim), jnp.float32),
        "pos_embed": nrm(next(keys), (1, nP, embed_dim)),
        "norm_g": jnp.ones((1, embed_dim), jnp.float32),
        "norm_b": jnp.zeros((1, embed_dim), jnp.float32),
        "w_head": nrm(next(keys), (embed_dim, num_classes)),
        "b_head": jnp.zeros((1, num_classes), jnp.float32),
    }

    # Shared adapter module. Adapter_ViT.__init__ zero-inits it; "random"
    # produces nonzero (post-training-like) weights so the adapter matmul path
    # is numerically exercised in the smoke test.
    if adapter_init == "zeros":
        params["w_down"] = jnp.zeros((embed_dim, adim), jnp.float32)
        params["b_down"] = jnp.zeros((1, adim), jnp.float32)
        params["w_up"] = jnp.zeros((adim, embed_dim), jnp.float32)
        params["b_up"] = jnp.zeros((1, embed_dim), jnp.float32)
    else:
        params["w_down"] = nrm(next(keys), (embed_dim, adim))
        params["b_down"] = nrm(next(keys), (1, adim))
        params["w_up"] = nrm(next(keys), (adim, embed_dim))
        params["b_up"] = nrm(next(keys), (1, embed_dim))

    blocks = []
    for _ in range(depth):
        blocks.append({
            "ln1_g": jnp.ones((1, embed_dim), jnp.float32),
            "ln1_b": jnp.zeros((1, embed_dim), jnp.float32),
            "w_qkv": nrm(next(keys), (embed_dim, 3 * embed_dim)),
            "b_qkv": jnp.zeros((1, 3 * embed_dim), jnp.float32),
            "w_proj": nrm(next(keys), (embed_dim, embed_dim)),
            "b_proj": jnp.zeros((1, embed_dim), jnp.float32),
            "ls1": jnp.ones((1, embed_dim), jnp.float32),
            "ln2_g": jnp.ones((1, embed_dim), jnp.float32),
            "ln2_b": jnp.zeros((1, embed_dim), jnp.float32),
            "w_fc1": nrm(next(keys), (embed_dim, hidden)),
            "b_fc1": jnp.zeros((1, hidden), jnp.float32),
            "w_fc2": nrm(next(keys), (hidden, embed_dim)),
            "b_fc2": jnp.zeros((1, embed_dim), jnp.float32),
            "ls2": jnp.ones((1, embed_dim), jnp.float32),
        })
    params["blocks"] = blocks
    return params


if __name__ == "__main__":
    key = jax.random.PRNGKey(0)
    k_params, k_x = jax.random.split(key)
    # nonzero adapter weights so the adapter (down/up) matmul path is exercised
    params = make_params(k_params, adapter_init="random")

    # PyTorch NCHW image input
    x = jax.random.normal(k_x, (2, 3, 16, 16), dtype=jnp.float32)

    logits = adapter_vit_forward(x, params)
    jax.block_until_ready(logits)
    assert logits.shape == (2, 10)
    assert jnp.all(jnp.isfinite(logits))
    print("KERNEL_OK")
</pallas_src>

<mosaic_0001>
module attributes {stable_mosaic.version = 11 : i64} {
  func.func @fused_vit_kernel(%arg0: i32, %arg1: i32, %arg2: memref<32x48xf32, #tpu.memory_space<vmem>>, %arg3: memref<48x32xf32, #tpu.memory_space<vmem>>, %arg4: memref<1x32xf32, #tpu.memory_space<vmem>>, %arg5: memref<16x32xf32, #tpu.memory_space<vmem>>, %arg6: memref<1x8x32xf32, #tpu.memory_space<vmem>>, %arg7: memref<1x1x96xf32, #tpu.memory_space<vmem>>, %arg8: memref<1x1x128xf32, #tpu.memory_space<vmem>>, %arg9: memref<1x32x96xbf16, #tpu.memory_space<vmem>>, %arg10: memref<1x32x32xbf16, #tpu.memory_space<vmem>>, %arg11: memref<1x32x128xbf16, #tpu.memory_space<vmem>>, %arg12: memref<1x128x32xbf16, #tpu.memory_space<vmem>>, %arg13: memref<32x4xbf16, #tpu.memory_space<vmem>>, %arg14: memref<1x4xf32, #tpu.memory_space<vmem>>, %arg15: memref<4x32xbf16, #tpu.memory_space<vmem>>, %arg16: memref<1x32xf32, #tpu.memory_space<vmem>>, %arg17: memref<1x32xf32, #tpu.memory_space<vmem>>, %arg18: memref<1x32xf32, #tpu.memory_space<vmem>>, %arg19: memref<32x10xf32, #tpu.memory_space<vmem>>, %arg20: memref<1x10xf32, #tpu.memory_space<vmem>>, %arg21: memref<2x10xf32, #tpu.memory_space<vmem>>, %arg22: memref<32x32xf32, #tpu.memory_space<vmem>>) attributes {dimension_semantics = [#tpu.dimension_semantics<parallel>, #tpu.dimension_semantics<arbitrary>], iteration_bounds = array<i64: 1, 2>, scalar_prefetch = 0 : i64, scratch_operands = 1 : i64, tpu.core_type = #tpu.core_type<tc>, window_params = [{transform_indices = @transform_0, window_bounds = array<i64: 32, 48>}, {pipeline_mode = #tpu.pipeline_mode<synchronous>, transform_indices = @transform_1, window_bounds = array<i64: 48, 32>}, {pipeline_mode = #tpu.pipeline_mode<synchronous>, transform_indices = @transform_2, window_bounds = array<i64: 1, 32>}, {pipeline_mode = #tpu.pipeline_mode<synchronous>, transform_indices = @transform_3, window_bounds = array<i64: 16, 32>}, {transform_indices = @transform_4, window_bounds = array<i64: 1, 8, 32>}, {transform_indices = @transform_5, window_bounds = array<i64: 1, 1, 96>}, {transform_indices = @transform_6, window_bounds = array<i64: 1, 1, 128>}, {transform_indices = @transform_7, window_bounds = array<i64: 1, 32, 96>}, {transform_indices = @transform_8, window_bounds = array<i64: 1, 32, 32>}, {transform_indices = @transform_9, window_bounds = array<i64: 1, 32, 128>}, {transform_indices = @transform_10, window_bounds = array<i64: 1, 128, 32>}, {pipeline_mode = #tpu.pipeline_mode<synchronous>, transform_indices = @transform_11, window_bounds = array<i64: 32, 4>}, {pipeline_mode = #tpu.pipeline_mode<synchronous>, transform_indices = @transform_12, window_bounds = array<i64: 1, 4>}, {pipeline_mode = #tpu.pipeline_mode<synchronous>, transform_indices = @transform_13, window_bounds = array<i64: 4, 32>}, {pipeline_mode = #tpu.pipeline_mode<synchronous>, transform_indices = @transform_14, window_bounds = array<i64: 1, 32>}, {pipeline_mode = #tpu.pipeline_mode<synchronous>, transform_indices = @transform_15, window_bounds = array<i64: 1, 32>}, {pipeline_mode = #tpu.pipeline_mode<synchronous>, transform_indices = @transform_16, window_bounds = array<i64: 1, 32>}, {pipeline_mode = #tpu.pipeline_mode<synchronous>, transform_indices = @transform_17, window_bounds = array<i64: 32, 10>}, {pipeline_mode = #tpu.pipeline_mode<synchronous>, transform_indices = @transform_18, window_bounds = array<i64: 1, 10>}, {transform_indices = @transform_19, window_bounds = array<i64: 2, 10>}]} {
    %c0_i32 = arith.constant 0 : i32
    %0 = arith.cmpi eq, %arg1, %c0_i32 : i32
    %1 = arith.extui %0 : i1 to i32
    %c0_i32_0 = arith.constant 0 : i32
    %2 = arith.cmpi ne, %1, %c0_i32_0 : i32
    scf.if %2 {
      %c0_66 = arith.constant 0 : index
      %c0_67 = arith.constant 0 : index
      %180 = vector.load %arg2[%c0_66, %c0_67] : memref<32x48xf32, #tpu.memory_space<vmem>>, vector<32x48xf32>
      %c0_68 = arith.constant 0 : index
      %c0_69 = arith.constant 0 : index
      %181 = vector.load %arg3[%c0_68, %c0_69] : memref<48x32xf32, #tpu.memory_space<vmem>>, vector<48x32xf32>
      %cst_70 = arith.constant dense<0.000000e+00> : vector<32x32xf32>
      %182 = tpu.matmul %180, %181, %cst_70 {dimension_numbers = #tpu.dot_dimension_numbers<[1], [0], [0], [1], [0, 0, 1, 1], [], []>} : vector<32x48xf32>, vector<48x32xf32>, vector<32x32xf32> -> vector<32x32xf32>
      %c0_71 = arith.constant 0 : index
      %c0_72 = arith.constant 0 : index
      %183 = vector.load %arg4[%c0_71, %c0_72] : memref<1x32xf32, #tpu.memory_space<vmem>>, vector<1x32xf32>
      %184 = vector.broadcast %183 : vector<1x32xf32> to vector<32x32xf32>
      %185 = arith.addf %182, %184 : vector<32x32xf32>
      %186 = vector.shape_cast %185 : vector<32x32xf32> to vector<2x16x32xf32>
      %c0_73 = arith.constant 0 : index
      %c0_74 = arith.constant 0 : index
      %187 = vector.load %arg5[%c0_73, %c0_74] : memref<16x32xf32, #tpu.memory_space<vmem>>, vector<16x32xf32>
      %188 = vector.shape_cast %187 : vector<16x32xf32> to vector<1x16x32xf32>
      %189 = vector.broadcast %188 : vector<1x16x32xf32> to vector<2x16x32xf32>
      %190 = arith.addf %186, %189 : vector<2x16x32xf32>
      %191 = vector.shape_cast %190 : vector<2x16x32xf32> to vector<32x32xf32>
      %c0_75 = arith.constant 0 : index
      %c0_76 = arith.constant 0 : index
      %192 = vector.load %arg22[%c0_75, %c0_76] : memref<32x32xf32, #tpu.memory_space<vmem>>, vector<32x32xf32>
      tpu.vector_store %arg22[%c0_75, %c0_76], %191 {strides = array<i32>} : memref<32x32xf32, #tpu.memory_space<vmem>>, vector<32x32xf32>,
    } else {
    }
    %c0 = arith.constant 0 : index
    %c0_1 = arith.constant 0 : index
    %3 = vector.load %arg22[%c0, %c0_1] : memref<32x32xf32, #tpu.memory_space<vmem>>, vector<32x32xf32>
    %c0_2 = arith.constant 0 : index
    %c0_3 = arith.constant 0 : index
    %c0_4 = arith.constant 0 : index
    %4 = vector.load %arg6[%c0_2, %c0_3, %c0_4] : memref<1x8x32xf32, #tpu.memory_space<vmem>>, vector<1x8x32xf32>
    %5 = vector.shape_cast %4 : vector<1x8x32xf32> to vector<8x32xf32>
    %6 = vector.extract_strided_slice %5 {offsets = [0, 0], sizes = [1, 32], strides = [1, 1]} : vector<8x32xf32> to vector<1x32xf32>
    %7 = vector.extract_strided_slice %5 {offsets = [1, 0], sizes = [1, 32], strides = [1, 1]} : vector<8x32xf32> to vector<1x32xf32>
    %8 = vector.extract_strided_slice %5 {offsets = [2, 0], sizes = [1, 32], strides = [1, 1]} : vector<8x32xf32> to vector<1x32xf32>
    %9 = vector.extract_strided_slice %5 {offsets = [3, 0], sizes = [1, 32], strides = [1, 1]} : vector<8x32xf32> to vector<1x32xf32>
    %10 = vector.extract_strided_slice %5 {offsets = [4, 0], sizes = [1, 32], strides = [1, 1]} : vector<8x32xf32> to vector<1x32xf32>
    %11 = vector.extract_strided_slice %5 {offsets = [5, 0], sizes = [1, 32], strides = [1, 1]} : vector<8x32xf32> to vector<1x32xf32>
    %12 = vector.extract_strided_slice %5 {offsets = [6, 0], sizes = [1, 32], strides = [1, 1]} : vector<8x32xf32> to vector<1x32xf32>
    %13 = vector.extract_strided_slice %5 {offsets = [7, 0], sizes = [1, 32], strides = [1, 1]} : vector<8x32xf32> to vector<1x32xf32>
    %cst = arith.constant dense<0.000000e+00> : vector<32xf32>
    %14 = vector.multi_reduction <add>, %3, %cst [1] : vector<32x32xf32> to vector<32xf32>
    %15 = vector.shape_cast %14 : vector<32xf32> to vector<32x1xf32>
    %cst_5 = arith.constant 3.200000e+01 : f32
    %16 = vector.broadcast %cst_5 : f32 to vector<32x1xf32>
    %17 = arith.divf %15, %16 : vector<32x1xf32>
    %18 = vector.broadcast %17 : vector<32x1xf32> to vector<32x32xf32>
    %19 = arith.subf %3, %18 : vector<32x32xf32>
    %20 = arith.mulf %19, %19 : vector<32x32xf32>
    %cst_6 = arith.constant dense<0.000000e+00> : vector<32xf32>
    %21 = vector.multi_reduction <add>, %20, %cst_6 [1] : vector<32x32xf32> to vector<32xf32>
    %22 = vector.shape_cast %21 : vector<32xf32> to vector<32x1xf32>
    %cst_7 = arith.constant 3.200000e+01 : f32
    %23 = vector.broadcast %cst_7 : f32 to vector<32x1xf32>
    %24 = arith.divf %22, %23 : vector<32x1xf32>
    %25 = vector.broadcast %17 : vector<32x1xf32> to vector<32x32xf32>
    %26 = arith.subf %3, %25 : vector<32x32xf32>
    %cst_8 = arith.constant 9.99999997E-7 : f32
    %27 = vector.broadcast %cst_8 : f32 to vector<32x1xf32>
    %28 = arith.addf %24, %27 : vector<32x1xf32>
    %29 = math.rsqrt %28 : vector<32x1xf32>
    %30 = vector.broadcast %29 : vector<32x1xf32> to vector<32x32xf32>
    %31 = arith.mulf %26, %30 : vector<32x32xf32>
    %32 = vector.broadcast %6 : vector<1x32xf32> to vector<32x32xf32>
    %33 = arith.mulf %31, %32 : vector<32x32xf32>
    %34 = vector.broadcast %7 : vector<1x32xf32> to vector<32x32xf32>
    %35 = arith.addf %33, %34 : vector<32x32xf32>
    %36 = arith.truncf %35 : vector<32x32xf32> to vector<32x32xbf16>
    %c0_9 = arith.constant 0 : index
    %c0_10 = arith.constant 0 : index
    %c0_11 = arith.constant 0 : index
    %37 = vector.load %arg9[%c0_9, %c0_10, %c0_11] : memref<1x32x96xbf16, #tpu.memory_space<vmem>>, vector<1x32x96xbf16>
    %38 = vector.shape_cast %37 : vector<1x32x96xbf16> to vector<32x96xbf16>
    %cst_12 = arith.constant dense<0.000000e+00> : vector<32x96xf32>
    %39 = tpu.matmul %36, %38, %cst_12 {dimension_numbers = #tpu.dot_dimension_numbers<[1], [0], [0], [1], [0, 0, 1, 1], [], []>} : vector<32x32xbf16>, vector<32x96xbf16>, vector<32x96xf32> -> vector<32x96xf32>
    %c0_13 = arith.constant 0 : index
    %c0_14 = arith.constant 0 : index
    %c0_15 = arith.constant 0 : index
    %40 = vector.load %arg7[%c0_13, %c0_14, %c0_15] : memref<1x1x96xf32, #tpu.memory_space<vmem>>, vector<1x1x96xf32>
    %41 = vector.shape_cast %40 : vector<1x1x96xf32> to vector<1x96xf32>
    %42 = vector.broadcast %41 : vector<1x96xf32> to vector<32x96xf32>
    %43 = arith.addf %39, %42 : vector<32x96xf32>
    %44 = vector.extract_strided_slice %43 {offsets = [0, 0], sizes = [32, 32], strides = [1, 1]} : vector<32x96xf32> to vector<32x32xf32>
    %cst_16 = arith.constant 2.500000e-01 : f32
    %45 = vector.broadcast %cst_16 : f32 to vector<32x32xf32>
    %46 = arith.mulf %44, %45 : vector<32x32xf32>
    %47 = vector.shape_cast %46 : vector<32x32xf32> to vector<2x16x32xf32>
    %48 = arith.truncf %47 : vector<2x16x32xf32> to vector<2x16x32xbf16>
    %49 = vector.extract_strided_slice %43 {offsets = [0, 32], sizes = [32, 32], strides = [1, 1]} : vector<32x96xf32> to vector<32x32xf32>
    %50 = vector.shape_cast %49 : vector<32x32xf32> to vector<2x16x32xf32>
    %51 = arith.truncf %50 : vector<2x16x32xf32> to vector<2x16x32xbf16>
    %52 = vector.extract_strided_slice %43 {offsets = [0, 64], sizes = [32, 32], strides = [1, 1]} : vector<32x96xf32> to vector<32x32xf32>
    %53 = vector.shape_cast %52 : vector<32x32xf32> to vector<2x16x32xf32>
    %54 = arith.truncf %53 : vector<2x16x32xf32> to vector<2x16x32xbf16>
    %55 = vector.extract_strided_slice %48 {offsets = [0, 0, 0], sizes = [2, 16, 16], strides = [1, 1, 1]} : vector<2x16x32xbf16> to vector<2x16x16xbf16>
    %56 = vector.extract_strided_slice %51 {offsets = [0, 0, 0], sizes = [2, 16, 16], strides = [1, 1, 1]} : vector<2x16x32xbf16> to vector<2x16x16xbf16>
    "tpu.trace_start"() <{level = 10 : i32, message = "bqd,bkd->bqk"}> : () -> ()
    %cst_17 = arith.constant dense<0.000000e+00> : vector<2x16x16xf32>
    %57 = tpu.matmul %55, %56, %cst_17 {dimension_numbers = #tpu.dot_dimension_numbers<[2], [2], [1], [1], [0, 0, 0, 1, 1, 1], [0], [0]>} : vector<2x16x16xbf16>, vector<2x16x16xbf16>, vector<2x16x16xf32> -> vector<2x16x16xf32>
    "tpu.trace_stop"() : () -> ()
    %cst_18 = arith.constant dense<0xFF800000> : vector<2x16xf32>
    %58 = vector.multi_reduction <maximumf>, %57, %cst_18 [2] : vector<2x16x16xf32> to vector<2x16xf32>
    %59 = vector.shape_cast %58 : vector<2x16xf32> to vector<2x16x1xf32>
    %60 = vector.broadcast %59 : vector<2x16x1xf32> to vector<2x16x16xf32>
    %61 = arith.subf %57, %60 : vector<2x16x16xf32>
    %62 = math.exp %61 : vector<2x16x16xf32>
    %cst_19 = arith.constant dense<0.000000e+00> : vector<2x16xf32>
    %63 = vector.multi_reduction <add>, %62, %cst_19 [2] : vector<2x16x16xf32> to vector<2x16xf32>
    %64 = vector.shape_cast %63 : vector<2x16xf32> to vector<2x16x1xf32>
    %65 = tpu.reciprocal %64 {approx = true} : vector<2x16x1xf32> -> vector<2x16x1xf32>
    %66 = vector.broadcast %65 : vector<2x16x1xf32> to vector<2x16x16xf32>
    %67 = arith.mulf %62, %66 : vector<2x16x16xf32>
    %68 = arith.truncf %67 : vector<2x16x16xf32> to vector<2x16x16xbf16>
    %69 = vector.extract_strided_slice %54 {offsets = [0, 0, 0], sizes = [2, 16, 16], strides = [1, 1, 1]} : vector<2x16x32xbf16> to vector<2x16x16xbf16>
    "tpu.trace_start"() <{level = 10 : i32, message = "bqk,bkd->bqd"}> : () -> ()
    %cst_20 = arith.constant dense<0.000000e+00> : vector<2x16x16xf32>
    %70 = tpu.matmul %68, %69, %cst_20 {dimension_numbers = #tpu.dot_dimension_numbers<[2], [1], [1], [2], [0, 0, 0, 1, 1, 2], [0], [0]>} : vector<2x16x16xbf16>, vector<2x16x16xbf16>, vector<2x16x16xf32> -> vector<2x16x16xf32>
    "tpu.trace_stop"() : () -> ()
    %71 = vector.extract_strided_slice %48 {offsets = [0, 0, 16], sizes = [2, 16, 16], strides = [1, 1, 1]} : vector<2x16x32xbf16> to vector<2x16x16xbf16>
    %72 = vector.extract_strided_slice %51 {offsets = [0, 0, 16], sizes = [2, 16, 16], strides = [1, 1, 1]} : vector<2x16x32xbf16> to vector<2x16x16xbf16>
    "tpu.trace_start"() <{level = 10 : i32, message = "bqd,bkd->bqk"}> : () -> ()
    %cst_21 = arith.constant dense<0.000000e+00> : vector<2x16x16xf32>
    %73 = tpu.matmul %71, %72, %cst_21 {dimension_numbers = #tpu.dot_dimension_numbers<[2], [2], [1], [1], [0, 0, 0, 1, 1, 1], [0], [0]>} : vector<2x16x16xbf16>, vector<2x16x16xbf16>, vector<2x16x16xf32> -> vector<2x16x16xf32>
    "tpu.trace_stop"() : () -> ()
    %cst_22 = arith.constant dense<0xFF800000> : vector<2x16xf32>
    %74 = vector.multi_reduction <maximumf>, %73, %cst_22 [2] : vector<2x16x16xf32> to vector<2x16xf32>
    %75 = vector.shape_cast %74 : vector<2x16xf32> to vector<2x16x1xf32>
    %76 = vector.broadcast %75 : vector<2x16x1xf32> to vector<2x16x16xf32>
    %77 = arith.subf %73, %76 : vector<2x16x16xf32>
    %78 = math.exp %77 : vector<2x16x16xf32>
    %cst_23 = arith.constant dense<0.000000e+00> : vector<2x16xf32>
    %79 = vector.multi_reduction <add>, %78, %cst_23 [2] : vector<2x16x16xf32> to vector<2x16xf32>
    %80 = vector.shape_cast %79 : vector<2x16xf32> to vector<2x16x1xf32>
    %81 = tpu.reciprocal %80 {approx = true} : vector<2x16x1xf32> -> vector<2x16x1xf32>
    %82 = vector.broadcast %81 : vector<2x16x1xf32> to vector<2x16x16xf32>
    %83 = arith.mulf %78, %82 : vector<2x16x16xf32>
    %84 = arith.truncf %83 : vector<2x16x16xf32> to vector<2x16x16xbf16>
    %85 = vector.extract_strided_slice %54 {offsets = [0, 0, 16], sizes = [2, 16, 16], strides = [1, 1, 1]} : vector<2x16x32xbf16> to vector<2x16x16xbf16>
    "tpu.trace_start"() <{level = 10 : i32, message = "bqk,bkd->bqd"}> : () -> ()
    %cst_24 = arith.constant dense<0.000000e+00> : vector<2x16x16xf32>
    %86 = tpu.matmul %84, %85, %cst_24 {dimension_numbers = #tpu.dot_dimension_numbers<[2], [1], [1], [2], [0, 0, 0, 1, 1, 2], [0], [0]>} : vector<2x16x16xbf16>, vector<2x16x16xbf16>, vector<2x16x16xf32> -> vector<2x16x16xf32>
    "tpu.trace_stop"() : () -> ()
    %87 = tpu.concatenate %70, %86 in 2 : vector<2x16x16xf32>, vector<2x16x16xf32> -> vector<2x16x32xf32>
    %88 = vector.shape_cast %87 : vector<2x16x32xf32> to vector<32x32xf32>
    %89 = arith.truncf %88 : vector<32x32xf32> to vector<32x32xbf16>
    %c0_25 = arith.constant 0 : index
    %c0_26 = arith.constant 0 : index
    %c0_27 = arith.constant 0 : index
    %90 = vector.load %arg10[%c0_25, %c0_26, %c0_27] : memref<1x32x32xbf16, #tpu.memory_space<vmem>>, vector<1x32x32xbf16>
    %91 = vector.shape_cast %90 : vector<1x32x32xbf16> to vector<32x32xbf16>
    %cst_28 = arith.constant dense<0.000000e+00> : vector<32x32xf32>
    %92 = tpu.matmul %89, %91, %cst_28 {dimension_numbers = #tpu.dot_dimension_numbers<[1], [0], [0], [1], [0, 0, 1, 1], [], []>} : vector<32x32xbf16>, vector<32x32xbf16>, vector<32x32xf32> -> vector<32x32xf32>
    %93 = vector.broadcast %8 : vector<1x32xf32> to vector<32x32xf32>
    %94 = arith.addf %92, %93 : vector<32x32xf32>
    %95 = vector.broadcast %9 : vector<1x32xf32> to vector<32x32xf32>
    %96 = arith.mulf %95, %94 : vector<32x32xf32>
    %97 = arith.addf %3, %96 : vector<32x32xf32>
    %cst_29 = arith.constant dense<0.000000e+00> : vector<32xf32>
    %98 = vector.multi_reduction <add>, %97, %cst_29 [1] : vector<32x32xf32> to vector<32xf32>
    %99 = vector.shape_cast %98 : vector<32xf32> to vector<32x1xf32>
    %cst_30 = arith.constant 3.200000e+01 : f32
    %100 = vector.broadcast %cst_30 : f32 to vector<32x1xf32>
    %101 = arith.divf %99, %100 : vector<32x1xf32>
    %102 = vector.broadcast %101 : vector<32x1xf32> to vector<32x32xf32>
    %103 = arith.subf %97, %102 : vector<32x32xf32>
    %104 = arith.mulf %103, %103 : vector<32x32xf32>
    %cst_31 = arith.constant dense<0.000000e+00> : vector<32xf32>
    %105 = vector.multi_reduction <add>, %104, %cst_31 [1] : vector<32x32xf32> to vector<32xf32>
    %106 = vector.shape_cast %105 : vector<32xf32> to vector<32x1xf32>
    %cst_32 = arith.constant 3.200000e+01 : f32
    %107 = vector.broadcast %cst_32 : f32 to vector<32x1xf32>
    %108 = arith.divf %106, %107 : vector<32x1xf32>
    %109 = vector.broadcast %101 : vector<32x1xf32> to vector<32x32xf32>
    %110 = arith.subf %97, %109 : vector<32x32xf32>
    %cst_33 = arith.constant 9.99999997E-7 : f32
    %111 = vector.broadcast %cst_33 : f32 to vector<32x1xf32>
    %112 = arith.addf %108, %111 : vector<32x1xf32>
    %113 = math.rsqrt %112 : vector<32x1xf32>
    %114 = vector.broadcast %113 : vector<32x1xf32> to vector<32x32xf32>
    %115 = arith.mulf %110, %114 : vector<32x32xf32>
    %116 = vector.broadcast %10 : vector<1x32xf32> to vector<32x32xf32>
    %117 = arith.mulf %115, %116 : vector<32x32xf32>
    %118 = vector.broadcast %11 : vector<1x32xf32> to vector<32x32xf32>
    %119 = arith.addf %117, %118 : vector<32x32xf32>
    %120 = arith.truncf %119 : vector<32x32xf32> to vector<32x32xbf16>
    %c0_34 = arith.constant 0 : index
    %c0_35 = arith.constant 0 : index
    %c0_36 = arith.constant 0 : index
    %121 = vector.load %arg11[%c0_34, %c0_35, %c0_36] : memref<1x32x128xbf16, #tpu.memory_space<vmem>>, vector<1x32x128xbf16>
    %122 = vector.shape_cast %121 : vector<1x32x128xbf16> to vector<32x128xbf16>
    %cst_37 = arith.constant dense<0.000000e+00> : vector<32x128xf32>
    %123 = tpu.matmul %120, %122, %cst_37 {dimension_numbers = #tpu.dot_dimension_numbers<[1], [0], [0], [1], [0, 0, 1, 1], [], []>} : vector<32x32xbf16>, vector<32x128xbf16>, vector<32x128xf32> -> vector<32x128xf32>
    %c0_38 = arith.constant 0 : index
    %c0_39 = arith.constant 0 : index
    %c0_40 = arith.constant 0 : index
    %124 = vector.load %arg8[%c0_38, %c0_39, %c0_40] : memref<1x1x128xf32, #tpu.memory_space<vmem>>, vector<1x1x128xf32>
    %125 = vector.shape_cast %124 : vector<1x1x128xf32> to vector<1x128xf32>
    %126 = vector.broadcast %125 : vector<1x128xf32> to vector<32x128xf32>
    %127 = arith.addf %123, %126 : vector<32x128xf32>
    %128 = arith.mulf %127, %127 : vector<32x128xf32>
    %129 = arith.mulf %127, %128 : vector<32x128xf32>
    %cst_41 = arith.constant 4.471500e-02 : f32
    %130 = vector.broadcast %cst_41 : f32 to vector<32x128xf32>
    %131 = arith.mulf %130, %129 : vector<32x128xf32>
    %132 = arith.addf %127, %131 : vector<32x128xf32>
    %cst_42 = arith.constant 0.797884583 : f32
    %133 = vector.broadcast %cst_42 : f32 to vector<32x128xf32>
    %134 = arith.mulf %133, %132 : vector<32x128xf32>
    %135 = math.tanh %134 : vector<32x128xf32>
    %cst_43 = arith.constant 1.000000e+00 : f32
    %136 = vector.broadcast %cst_43 : f32 to vector<32x128xf32>
    %137 = arith.addf %136, %135 : vector<32x128xf32>
    %cst_44 = arith.constant 5.000000e-01 : f32
    %138 = vector.broadcast %cst_44 : f32 to vector<32x128xf32>
    %139 = arith.mulf %138, %137 : vector<32x128xf32>
    %140 = arith.mulf %127, %139 : vector<32x128xf32>
    %141 = arith.truncf %140 : vector<32x128xf32> to vector<32x128xbf16>
    %c0_45 = arith.constant 0 : index
    %c0_46 = arith.constant 0 : index
    %c0_47 = arith.constant 0 : index
    %142 = vector.load %arg12[%c0_45, %c0_46, %c0_47] : memref<1x128x32xbf16, #tpu.memory_space<vmem>>, vector<1x128x32xbf16>
    %143 = vector.shape_cast %142 : vector<1x128x32xbf16> to vector<128x32xbf16>
    %cst_48 = arith.constant dense<0.000000e+00> : vector<32x32xf32>
    %144 = tpu.matmul %141, %143, %cst_48 {dimension_numbers = #tpu.dot_dimension_numbers<[1], [0], [0], [1], [0, 0, 1, 1], [], []>} : vector<32x128xbf16>, vector<128x32xbf16>, vector<32x32xf32> -> vector<32x32xf32>
    %145 = vector.broadcast %12 : vector<1x32xf32> to vector<32x32xf32>
    %146 = arith.addf %144, %145 : vector<32x32xf32>
    %147 = vector.broadcast %13 : vector<1x32xf32> to vector<32x32xf32>
    %148 = arith.mulf %147, %146 : vector<32x32xf32>
    %149 = arith.truncf %148 : vector<32x32xf32> to vector<32x32xbf16>
    %c0_49 = arith.constant 0 : index
    %c0_50 = arith.constant 0 : index
    %150 = vector.load %arg13[%c0_49, %c0_50] : memref<32x4xbf16, #tpu.memory_space<vmem>>, vector<32x4xbf16>
    %cst_51 = arith.constant dense<0.000000e+00> : vector<32x4xf32>
    %151 = tpu.matmul %149, %150, %cst_51 {dimension_numbers = #tpu.dot_dimension_numbers<[1], [0], [0], [1], [0, 0, 1, 1], [], []>} : vector<32x32xbf16>, vector<32x4xbf16>, vector<32x4xf32> -> vector<32x4xf32>
    %c0_52 = arith.constant 0 : index
    %c0_53 = arith.constant 0 : index
    %152 = vector.load %arg14[%c0_52, %c0_53] : memref<1x4xf32, #tpu.memory_space<vmem>>, vector<1x4xf32>
    %153 = vector.broadcast %152 : vector<1x4xf32> to vector<32x4xf32>
    %154 = arith.addf %151, %153 : vector<32x4xf32>
    %155 = arith.mulf %154, %154 : vector<32x4xf32>
    %156 = arith.mulf %154, %155 : vector<32x4xf32>
    %cst_54 = arith.constant 4.471500e-02 : f32
    %157 = vector.broadcast %cst_54 : f32 to vector<32x4xf32>
    %158 = arith.mulf %157, %156 : vector<32x4xf32>
    %159 = arith.addf %154, %158 : vector<32x4xf32>
    %cst_55 = arith.constant 0.797884583 : f32
    %160 = vector.broadcast %cst_55 : f32 to vector<32x4xf32>
    %161 = arith.mulf %160, %159 : vector<32x4xf32>
    %162 = math.tanh %161 : vector<32x4xf32>
    %cst_56 = arith.constant 1.000000e+00 : f32
    %163 = vector.broadcast %cst_56 : f32 to vector<32x4xf32>
    %164 = arith.addf %163, %162 : vector<32x4xf32>
    %cst_57 = arith.constant 5.000000e-01 : f32
    %165 = vector.broadcast %cst_57 : f32 to vector<32x4xf32>
    %166 = arith.mulf %165, %164 : vector<32x4xf32>
    %167 = arith.mulf %154, %166 : vector<32x4xf32>
    %168 = arith.truncf %167 : vector<32x4xf32> to vector<32x4xbf16>
    %c0_58 = arith.constant 0 : index
    %c0_59 = arith.constant 0 : index
    %169 = vector.load %arg15[%c0_58, %c0_59] : memref<4x32xbf16, #tpu.memory_space<vmem>>, vector<4x32xbf16>
    %cst_60 = arith.constant dense<0.000000e+00> : vector<32x32xf32>
    %170 = tpu.matmul %168, %169, %cst_60 {dimension_numbers = #tpu.dot_dimension_numbers<[1], [0], [0], [1], [0, 0, 1, 1], [], []>} : vector<32x4xbf16>, vector<4x32xbf16>, vector<32x32xf32> -> vector<32x32xf32>
    %c0_61 = arith.constant 0 : index
    %c0_62 = arith.constant 0 : index
    %171 = vector.load %arg16[%c0_61, %c0_62] : memref<1x32xf32, #tpu.memory_space<vmem>>, vector<1x32xf32>
    %172 = vector.broadcast %171 : vector<1x32xf32> to vector<32x32xf32>
    %173 = arith.addf %170, %172 : vector<32x32xf32>
    %174 = arith.addf %173, %148 : vector<32x32xf32>
    %175 = arith.addf %174, %97 : vector<32x32xf32>
    %c0_63 = arith.constant 0 : index
    %c0_64 = arith.constant 0 : index
    %176 = vector.load %arg22[%c0_63, %c0_64] : memref<32x32xf32, #tpu.memory_space<vmem>>, vector<32x32xf32>
    tpu.vector_store %arg22[%c0_63, %c0_64], %175 {strides = array<i32>} : memref<32x32xf32, #tpu.memory_space<vmem>>, vector<32x32xf32>,
    %c1_i32 = arith.constant 1 : i32
    %177 = arith.cmpi eq, %arg1, %c1_i32 : i32
    %178 = arith.extui %177 : i1 to i32
    %c0_i32_65 = arith.constant 0 : i32
    %179 = arith.cmpi ne, %178, %c0_i32_65 : i32
    scf.if %179 {
      %c0_66 = arith.constant 0 : index
      %c0_67 = arith.constant 0 : index
      %180 = vector.load %arg17[%c0_66, %c0_67] : memref<1x32xf32, #tpu.memory_space<vmem>>, vector<1x32xf32>
      %c0_68 = arith.constant 0 : index
      %c0_69 = arith.constant 0 : index
      %181 = vector.load %arg18[%c0_68, %c0_69] : memref<1x32xf32, #tpu.memory_space<vmem>>, vector<1x32xf32>
      %cst_70 = arith.constant dense<0.000000e+00> : vector<32xf32>
      %182 = vector.multi_reduction <add>, %175, %cst_70 [1] : vector<32x32xf32> to vector<32xf32>
      %183 = vector.shape_cast %182 : vector<32xf32> to vector<32x1xf32>
      %cst_71 = arith.constant 3.200000e+01 : f32
      %184 = vector.broadcast %cst_71 : f32 to vector<32x1xf32>
      %185 = arith.divf %183, %184 : vector<32x1xf32>
      %186 = vector.broadcast %185 : vector<32x1xf32> to vector<32x32xf32>
      %187 = arith.subf %175, %186 : vector<32x32xf32>
      %188 = arith.mulf %187, %187 : vector<32x32xf32>
      %cst_72 = arith.constant dense<0.000000e+00> : vector<32xf32>
      %189 = vector.multi_reduction <add>, %188, %cst_72 [1] : vector<32x32xf32> to vector<32xf32>
      %190 = vector.shape_cast %189 : vector<32xf32> to vector<32x1xf32>
      %cst_73 = arith.constant 3.200000e+01 : f32
      %191 = vector.broadcast %cst_73 : f32 to vector<32x1xf32>
      %192 = arith.divf %190, %191 : vector<32x1xf32>
      %193 = vector.broadcast %185 : vector<32x1xf32> to vector<32x32xf32>
      %194 = arith.subf %175, %193 : vector<32x32xf32>
      %cst_74 = arith.constant 9.99999997E-7 : f32
      %195 = vector.broadcast %cst_74 : f32 to vector<32x1xf32>
      %196 = arith.addf %192, %195 : vector<32x1xf32>
      %197 = math.rsqrt %196 : vector<32x1xf32>
      %198 = vector.broadcast %197 : vector<32x1xf32> to vector<32x32xf32>
      %199 = arith.mulf %194, %198 : vector<32x32xf32>
      %200 = vector.broadcast %180 : vector<1x32xf32> to vector<32x32xf32>
      %201 = arith.mulf %199, %200 : vector<32x32xf32>
      %202 = vector.broadcast %181 : vector<1x32xf32> to vector<32x32xf32>
      %203 = arith.addf %201, %202 : vector<32x32xf32>
      %204 = vector.shape_cast %203 : vector<32x32xf32> to vector<2x16x32xf32>
      %cst_75 = arith.constant dense<0.000000e+00> : vector<2x32xf32>
      %205 = vector.multi_reduction <add>, %204, %cst_75 [1] : vector<2x16x32xf32> to vector<2x32xf32>
      %cst_76 = arith.constant 1.600000e+01 : f32
      %206 = vector.broadcast %cst_76 : f32 to vector<2x32xf32>
      %207 = arith.divf %205, %206 : vector<2x32xf32>
      %c0_77 = arith.constant 0 : index
      %c0_78 = arith.constant 0 : index
      %208 = vector.load %arg19[%c0_77, %c0_78] : memref<32x10xf32, #tpu.memory_space<vmem>>, vector<32x10xf32>
      %cst_79 = arith.constant dense<0.000000e+00> : vector<2x10xf32>
      %209 = tpu.matmul %207, %208, %cst_79 {dimension_numbers = #tpu.dot_dimension_numbers<[1], [0], [0], [1], [0, 0, 1, 1], [], []>} : vector<2x32xf32>, vector<32x10xf32>, vector<2x10xf32> -> vector<2x10xf32>
      %c0_80 = arith.constant 0 : index
      %c0_81 = arith.constant 0 : index
      %210 = vector.load %arg20[%c0_80, %c0_81] : memref<1x10xf32, #tpu.memory_space<vmem>>, vector<1x10xf32>
      %211 = vector.broadcast %210 : vector<1x10xf32> to vector<2x10xf32>
      %212 = arith.addf %209, %211 : vector<2x10xf32>
      %c0_82 = arith.constant 0 : index
      %c0_83 = arith.constant 0 : index
      %213 = vector.load %arg21[%c0_82, %c0_83] : memref<2x10xf32, #tpu.memory_space<vmem>>, vector<2x10xf32>
      tpu.vector_store %arg21[%c0_82, %c0_83], %212 {strides = array<i32>} : memref<2x10xf32, #tpu.memory_space<vmem>>, vector<2x10xf32>,
    } else {
    }
    return
  }
  func.func @transform_0(%arg0: i32, %arg1: i32) -> (i32, i32) {
    %c0_i32 = arith.constant 0 : i32
    %c0_i32_0 = arith.constant 0 : i32
    return %arg0, %c0_i32 : i32, i32
  }
  func.func @transform_1(%arg0: i32, %arg1: i32) -> (i32, i32) {
    %c0_i32 = arith.constant 0 : i32
    %c0_i32_0 = arith.constant 0 : i32
    %c0_i32_1 = arith.constant 0 : i32
    return %c0_i32, %c0_i32_0 : i32, i32
  }
  func.func @transform_2(%arg0: i32, %arg1: i32) -> (i32, i32) {
    %c0_i32 = arith.constant 0 : i32
    %c0_i32_0 = arith.constant 0 : i32
    %c0_i32_1 = arith.constant 0 : i32
    return %c0_i32, %c0_i32_0 : i32, i32
  }
  func.func @transform_3(%arg0: i32, %arg1: i32) -> (i32, i32) {
    %c0_i32 = arith.constant 0 : i32
    %c0_i32_0 = arith.constant 0 : i32
    %c0_i32_1 = arith.constant 0 : i32
    return %c0_i32, %c0_i32_0 : i32, i32
  }
  func.func @transform_4(%arg0: i32, %arg1: i32) -> (i32, i32, i32) {
    %c0_i32 = arith.constant 0 : i32
    %c0_i32_0 = arith.constant 0 : i32
    %c0_i32_1 = arith.constant 0 : i32
    return %arg1, %c0_i32, %c0_i32_0 : i32, i32, i32
  }
  func.func @transform_5(%arg0: i32, %arg1: i32) -> (i32, i32, i32) {
    %c0_i32 = arith.constant 0 : i32
    %c0_i32_0 = arith.constant 0 : i32
    %c0_i32_1 = arith.constant 0 : i32
    return %arg1, %c0_i32, %c0_i32_0 : i32, i32, i32
  }
  func.func @transform_6(%arg0: i32, %arg1: i32) -> (i32, i32, i32) {
    %c0_i32 = arith.constant 0 : i32
    %c0_i32_0 = arith.constant 0 : i32
    %c0_i32_1 = arith.constant 0 : i32
    return %arg1, %c0_i32, %c0_i32_0 : i32, i32, i32
  }
  func.func @transform_7(%arg0: i32, %arg1: i32) -> (i32, i32, i32) {
    %c0_i32 = arith.constant 0 : i32
    %c0_i32_0 = arith.constant 0 : i32
    %c0_i32_1 = arith.constant 0 : i32
    return %arg1, %c0_i32, %c0_i32_0 : i32, i32, i32
  }
  func.func @transform_8(%arg0: i32, %arg1: i32) -> (i32, i32, i32) {
    %c0_i32 = arith.constant 0 : i32
    %c0_i32_0 = arith.constant 0 : i32
    %c0_i32_1 = arith.constant 0 : i32
    return %arg1, %c0_i32, %c0_i32_0 : i32, i32, i32
  }
  func.func @transform_9(%arg0: i32, %arg1: i32) -> (i32, i32, i32) {
    %c0_i32 = arith.constant 0 : i32
    %c0_i32_0 = arith.constant 0 : i32
    %c0_i32_1 = arith.constant 0 : i32
    return %arg1, %c0_i32, %c0_i32_0 : i32, i32, i32
  }
  func.func @transform_10(%arg0: i32, %arg1: i32) -> (i32, i32, i32) {
    %c0_i32 = arith.constant 0 : i32
    %c0_i32_0 = arith.constant 0 : i32
    %c0_i32_1 = arith.constant 0 : i32
    return %arg1, %c0_i32, %c0_i32_0 : i32, i32, i32
  }
  func.func @transform_11(%arg0: i32, %arg1: i32) -> (i32, i32) {
    %c0_i32 = arith.constant 0 : i32
    %c0_i32_0 = arith.constant 0 : i32
    %c0_i32_1 = arith.constant 0 : i32
    return %c0_i32, %c0_i32_0 : i32, i32
  }
  func.func @transform_12(%arg0: i32, %arg1: i32) -> (i32, i32) {
    %c0_i32 = arith.constant 0 : i32
    %c0_i32_0 = arith.constant 0 : i32
    %c0_i32_1 = arith.constant 0 : i32
    return %c0_i32, %c0_i32_0 : i32, i32
  }
  func.func @transform_13(%arg0: i32, %arg1: i32) -> (i32, i32) {
    %c0_i32 = arith.constant 0 : i32
    %c0_i32_0 = arith.constant 0 : i32
    %c0_i32_1 = arith.constant 0 : i32
    return %c0_i32, %c0_i32_0 : i32, i32
  }
  func.func @transform_14(%arg0: i32, %arg1: i32) -> (i32, i32) {
    %c0_i32 = arith.constant 0 : i32
    %c0_i32_0 = arith.constant 0 : i32
    %c0_i32_1 = arith.constant 0 : i32
    return %c0_i32, %c0_i32_0 : i32, i32
  }
  func.func @transform_15(%arg0: i32, %arg1: i32) -> (i32, i32) {
    %c0_i32 = arith.constant 0 : i32
    %c0_i32_0 = arith.constant 0 : i32
    %c0_i32_1 = arith.constant 0 : i32
    return %c0_i32, %c0_i32_0 : i32, i32
  }
  func.func @transform_16(%arg0: i32, %arg1: i32) -> (i32, i32) {
    %c0_i32 = arith.constant 0 : i32
    %c0_i32_0 = arith.constant 0 : i32
    %c0_i32_1 = arith.constant 0 : i32
    return %c0_i32, %c0_i32_0 : i32, i32
  }
  func.func @transform_17(%arg0: i32, %arg1: i32) -> (i32, i32) {
    %c0_i32 = arith.constant 0 : i32
    %c0_i32_0 = arith.constant 0 : i32
    %c0_i32_1 = arith.constant 0 : i32
    return %c0_i32, %c0_i32_0 : i32, i32
  }
  func.func @transform_18(%arg0: i32, %arg1: i32) -> (i32, i32) {
    %c0_i32 = arith.constant 0 : i32
    %c0_i32_0 = arith.constant 0 : i32
    %c0_i32_1 = arith.constant 0 : i32
    return %c0_i32, %c0_i32_0 : i32, i32
  }
  func.func @transform_19(%arg0: i32, %arg1: i32) -> (i32, i32) {
    %c0_i32 = arith.constant 0 : i32
    %c0_i32_0 = arith.constant 0 : i32
    return %arg0, %c0_i32 : i32, i32
  }
}

</mosaic_0001>

<llo_original>
// kernel: tpu_custom_call.1
$region0: #{tpu_custom_call.1}
  #allocation0 [shape = 'u32[]', space=smem, size = 0x4, offset = 0x4, fixed_abs, tag = 'smem constant byte address 0x4 - core index']
  #allocation1 [shape = 'u32[144,128]{1,0:T(1,128)}', space=vmem, size = 0x12000, scoped, tag = 'internal scratch']
  #allocation2 [shape = 'f32[32,32]{1,0:T(8,128)}', space=vmem, size = 0x4000, scoped, tag = 'scratch operand']
  %s0 = inlined_call_operand.vmem [shape: f32[32,48], index: 0, kind: input, shape index: {}]
  %s1 = inlined_call_operand.vmem [shape: f32[48,32], index: 1, kind: input, shape index: {}]
  %s2 = inlined_call_operand.vmem [shape: f32[1,32], index: 2, kind: input, shape index: {}]
  %s3 = inlined_call_operand.vmem [shape: f32[16,32], index: 3, kind: input, shape index: {}]
  %s4 = inlined_call_operand.vmem [shape: f32[2,8,32], index: 4, kind: input, shape index: {}]
  %s5 = inlined_call_operand.vmem [shape: f32[2,1,96], index: 5, kind: input, shape index: {}]
  %s6 = inlined_call_operand.vmem [shape: f32[2,1,128], index: 6, kind: input, shape index: {}]
  %s7 = inlined_call_operand.vmem [shape: bf16[2,32,96], index: 7, kind: input, shape index: {}]
  %s8 = inlined_call_operand.vmem [shape: bf16[2,32,32], index: 8, kind: input, shape index: {}]
  %s9 = inlined_call_operand.vmem [shape: bf16[2,32,128], index: 9, kind: input, shape index: {}]
  %s10 = inlined_call_operand.vmem [shape: bf16[2,128,32], index: 10, kind: input, shape index: {}]
  %s11 = inlined_call_operand.vmem [shape: bf16[32,4], index: 11, kind: input, shape index: {}]
  %s12 = inlined_call_operand.vmem [shape: f32[1,4], index: 12, kind: input, shape index: {}]
  %s13 = inlined_call_operand.vmem [shape: bf16[4,32], index: 13, kind: input, shape index: {}]
  %s14 = inlined_call_operand.vmem [shape: f32[1,32], index: 14, kind: input, shape index: {}]
  %s15 = inlined_call_operand.vmem [shape: f32[1,32], index: 15, kind: input, shape index: {}]
  %s16 = inlined_call_operand.vmem [shape: f32[1,32], index: 16, kind: input, shape index: {}]
  %s17 = inlined_call_operand.vmem [shape: f32[32,10], index: 17, kind: input, shape index: {}]
  %s18 = inlined_call_operand.vmem [shape: f32[1,10], index: 18, kind: input, shape index: {}]
  %s19 = inlined_call_operand.hbm [shape: f32[2,10], index: 19, kind: output, shape index: {}]
  %s20 = sld [smem:[#allocation0]]
  $region117: #{tpu_custom_call.1} parent=0
    _
  %s22 = ssub.s32 1, %s20
  %s23 = scalar_select 0, %s22, %s20
  $region1: #{tpu_custom_call.1} parent=0
    #allocation3 [shape = 'u8[1024]{0}', space=vmem, size = 0x400, scoped, tag = 'output window, operand 0, single buffered']
    #allocation4 [shape = 's32[2]{0}', space=sflag, size = 0x8, scoped, tag = 'scoped memory for tpu_custom_call.1']
    %24 = vsyncpa [#allocation4], 0
    loop: start=0, step=1, limit=4
    $region2: #{tpu_custom_call.1} parent=1 // loop_pre_header
      _
    $region3: #{tpu_custom_call.1} parent=1 // loop_header
      %s26 = sphi 0, %s30
      %p27 = scmp.ge.s32.totalorder %s26, 4
      %s33 = sphi 0, %s45
      %s34 = sphi 0, %s41
      %s35 = sphi 0, %s33
      %s36 = sphi 0, %s34
      %s37 = sphi 0, %s35
      %s38 = sphi 0, %s36
      %s48 = sphi 0, %s50
      %s51 = sphi 0, %s48
      %s52 = sphi 0, %s51
      %s68 = sphi 0, %s52
      %s72 = sphi 0, %s72
      %s74 = sphi 0, %s72
      %s75 = sphi 0, %s74
      %s89 = sphi 0, %s75
      %s93 = sphi 0, %s93
      %s95 = sphi 0, %s93
      %s96 = sphi 0, %s95
      %s110 = sphi 0, %s96
      %s114 = sphi 0, %s114
      %s116 = sphi 0, %s114
      %s117 = sphi 0, %s116
      %s131 = sphi 0, %s117
      %s137 = sphi 0, %s139
      %s140 = sphi 0, %s137
      %s141 = sphi 0, %s140
      %s157 = sphi 0, %s141
      %s163 = sphi 0, %s165
      %s166 = sphi 0, %s163
      %s167 = sphi 0, %s166
      %s183 = sphi 0, %s167
      %s189 = sphi 0, %s191
      %s192 = sphi 0, %s189
      %s193 = sphi 0, %s192
      %s209 = sphi 0, %s193
      %s215 = sphi 0, %s217
      %s218 = sphi 0, %s215
      %s219 = sphi 0, %s218
      %s235 = sphi 0, %s219
      %s241 = sphi 0, %s243
      %s244 = sphi 0, %s241
      %s245 = sphi 0, %s244
      %s261 = sphi 0, %s245
      %s267 = sphi 0, %s269
      %s270 = sphi 0, %s267
      %s271 = sphi 0, %s270
      %s287 = sphi 0, %s271
      %s293 = sphi 0, %s295
      %s296 = sphi 0, %s293
      %s297 = sphi 0, %s296
      %s313 = sphi 0, %s297
      %s317 = sphi 0, %s317
      %s319 = sphi 0, %s317
      %s320 = sphi 0, %s319
      %s334 = sphi 0, %s320
      %s338 = sphi 0, %s338
      %s340 = sphi 0, %s338
      %s341 = sphi 0, %s340
      %s355 = sphi 0, %s341
      %s359 = sphi 0, %s359
      %s361 = sphi 0, %s359
      %s362 = sphi 0, %s361
      %s376 = sphi 0, %s362
      %s380 = sphi 0, %s380
      %s382 = sphi 0, %s380
      %s383 = sphi 0, %s382
      %s397 = sphi 0, %s383
      %s401 = sphi 0, %s401
      %s403 = sphi 0, %s401
      %s404 = sphi 0, %s403
      %s418 = sphi 0, %s404
      %s422 = sphi 0, %s422
      %s424 = sphi 0, %s422
      %s425 = sphi 0, %s424
      %s439 = sphi 0, %s425
      %s443 = sphi 0, %s443
      %s445 = sphi 0, %s443
      %s446 = sphi 0, %s445
      %s460 = sphi 0, %s446
      %s464 = sphi 0, %s464
      %s466 = sphi 0, %s464
      %s467 = sphi 0, %s466
      %s481 = sphi 0, %s467
      %s487 = sphi 0, %s489
      %s490 = sphi 0, %s487
      %s491 = sphi 0, %s490
      %s507 = sphi 0, %s491
    $region4: #{tpu_custom_call.1} parent=1 // loop_header_branch
      %29 = sbr.rel (%p27) target = $region8
    $region5: #{tpu_custom_call.1} parent=1 // loop_body
      %s31 = ssub.s32 %s26, 1
      %s32 = ssub.s32 %s26, 2
      %s39 = sadd.s32 1, %s34
      %p40 = scmp.ge.s32.totalorder %s39, 2
      %s41 = scalar_select %p40, 0, %s39
      %s42 = sadd.s32 1, %s33
      %s43 = scalar_select %p40, %s42, %s33
      %p44 = scmp.ge.s32.totalorder %s43, 1
      %s45 = scalar_select %p44, 0, %s43
      %s46 = ssub.s32 %s33, %s45
      %p47 = scmp.eq.s32.totalorder %s46, 0
      %s49 = sadd.s32 %s48, 1
      %s50 = scalar_select %p47, %s48, %s49
      %p53 = pneg %p47
      %p54 = scmp.eq.s32.totalorder %s26, 1
      %p55 = por %p53, %p54
      %p56 = scmp.ne.s32.totalorder %s48, %s51
      %p57 = scmp.eq.s32.totalorder %s26, 0
      %p58 = por %p56, %p57
      %p59 = scmp.ne.s32.totalorder %s48, %s51
      %p60 = scmp.eq.s32.totalorder %s31, 1
      %p61 = por %p59, %p60
      %p62 = scmp.ne.s32.totalorder %s51, %s52
      %p63 = scmp.eq.s32.totalorder %s31, 0
      %p64 = por %p62, %p63
      %p65 = scmp.ne.s32.totalorder %s51, %s52
      %p66 = scmp.eq.s32.totalorder %s32, 1
      %p67 = por %p65, %p66
      %p69 = scmp.ne.s32.totalorder %s52, %s68
      %p70 = scmp.eq.s32.totalorder %s32, 0
      %p71 = por %p69, %p70
      %s73 = sadd.s32 %s72, 1
      %p76 = scmp.eq.s32.totalorder %s26, 1
      %p77 = scmp.ne.s32.totalorder %s72, %s74
      %p78 = scmp.eq.s32.totalorder %s26, 0
      %p79 = por %p77, %p78
      %p80 = scmp.ne.s32.totalorder %s72, %s74
      %p81 = scmp.eq.s32.totalorder %s31, 1
      %p82 = por %p80, %p81
      %p83 = scmp.ne.s32.totalorder %s74, %s75
      %p84 = scmp.eq.s32.totalorder %s31, 0
      %p85 = por %p83, %p84
      %p86 = scmp.ne.s32.totalorder %s74, %s75
      %p87 = scmp.eq.s32.totalorder %s32, 1
      %p88 = por %p86, %p87
      %p90 = scmp.ne.s32.totalorder %s75, %s89
      %p91 = scmp.eq.s32.totalorder %s32, 0
      %p92 = por %p90, %p91
      %s94 = sadd.s32 %s93, 1
      %p97 = scmp.eq.s32.totalorder %s26, 1
      %p98 = scmp.ne.s32.totalorder %s93, %s95
      %p99 = scmp.eq.s32.totalorder %s26, 0
      %p100 = por %p98, %p99
      %p101 = scmp.ne.s32.totalorder %s93, %s95
      %p102 = scmp.eq.s32.totalorder %s31, 1
      %p103 = por %p101, %p102
      %p104 = scmp.ne.s32.totalorder %s95, %s96
      %p105 = scmp.eq.s32.totalorder %s31, 0
      %p106 = por %p104, %p105
      %p107 = scmp.ne.s32.totalorder %s95, %s96
      %p108 = scmp.eq.s32.totalorder %s32, 1
      %p109 = por %p107, %p108
      %p111 = scmp.ne.s32.totalorder %s96, %s110
      %p112 = scmp.eq.s32.totalorder %s32, 0
      %p113 = por %p111, %p112
      %s115 = sadd.s32 %s114, 1
      %p118 = scmp.eq.s32.totalorder %s26, 1
      %p119 = scmp.ne.s32.totalorder %s114, %s116
      %p120 = scmp.eq.s32.totalorder %s26, 0
      %p121 = por %p119, %p120
      %p122 = scmp.ne.s32.totalorder %s114, %s116
      %p123 = scmp.eq.s32.totalorder %s31, 1
      %p124 = por %p122, %p123
      %p125 = scmp.ne.s32.totalorder %s116, %s117
      %p126 = scmp.eq.s32.totalorder %s31, 0
      %p127 = por %p125, %p126
      %p128 = scmp.ne.s32.totalorder %s116, %s117
      %p129 = scmp.eq.s32.totalorder %s32, 1
      %p130 = por %p128, %p129
      %p132 = scmp.ne.s32.totalorder %s117, %s131
      %p133 = scmp.eq.s32.totalorder %s32, 0
      %p134 = por %p132, %p133
      %s135 = ssub.s32 %s34, %s41
      %p136 = scmp.eq.s32.totalorder %s135, 0
      %s138 = sadd.s32 %s137, 1
      %s139 = scalar_select %p136, %s137, %s138
      %p142 = pneg %p136
      %p143 = scmp.eq.s32.totalorder %s26, 1
      %p144 = por %p142, %p143
      %p145 = scmp.ne.s32.totalorder %s137, %s140
      %p146 = scmp.eq.s32.totalorder %s26, 0
      %p147 = por %p145, %p146
      %p148 = scmp.ne.s32.totalorder %s137, %s140
      %p149 = scmp.eq.s32.totalorder %s31, 1
      %p150 = por %p148, %p149
      %p151 = scmp.ne.s32.totalorder %s140, %s141
      %p152 = scmp.eq.s32.totalorder %s31, 0
      %p153 = por %p151, %p152
      %p154 = scmp.ne.s32.totalorder %s140, %s141
      %p155 = scmp.eq.s32.totalorder %s32, 1
      %p156 = por %p154, %p155
      %p158 = scmp.ne.s32.totalorder %s141, %s157
      %p159 = scmp.eq.s32.totalorder %s32, 0
      %p160 = por %p158, %p159
      %s161 = ssub.s32 %s34, %s41
      %p162 = scmp.eq.s32.totalorder %s161, 0
      %s164 = sadd.s32 %s163, 1
      %s165 = scalar_select %p162, %s163, %s164
      %p168 = pneg %p162
      %p169 = scmp.eq.s32.totalorder %s26, 1
      %p170 = por %p168, %p169
      %p171 = scmp.ne.s32.totalorder %s163, %s166
      %p172 = scmp.eq.s32.totalorder %s26, 0
      %p173 = por %p171, %p172
      %p174 = scmp.ne.s32.totalorder %s163, %s166
      %p175 = scmp.eq.s32.totalorder %s31, 1
      %p176 = por %p174, %p175
      %p177 = scmp.ne.s32.totalorder %s166, %s167
      %p178 = scmp.eq.s32.totalorder %s31, 0
      %p179 = por %p177, %p178
      %p180 = scmp.ne.s32.totalorder %s166, %s167
      %p181 = scmp.eq.s32.totalorder %s32, 1
      %p182 = por %p180, %p181
      %p184 = scmp.ne.s32.totalorder %s167, %s183
      %p185 = scmp.eq.s32.totalorder %s32, 0
      %p186 = por %p184, %p185
      %s187 = ssub.s32 %s34, %s41
      %p188 = scmp.eq.s32.totalorder %s187, 0
      %s190 = sadd.s32 %s189, 1
      %s191 = scalar_select %p188, %s189, %s190
      %p194 = pneg %p188
      %p195 = scmp.eq.s32.totalorder %s26, 1
      %p196 = por %p194, %p195
      %p197 = scmp.ne.s32.totalorder %s189, %s192
      %p198 = scmp.eq.s32.totalorder %s26, 0
      %p199 = por %p197, %p198
      %p200 = scmp.ne.s32.totalorder %s189, %s192
      %p201 = scmp.eq.s32.totalorder %s31, 1
      %p202 = por %p200, %p201
      %p203 = scmp.ne.s32.totalorder %s192, %s193
      %p204 = scmp.eq.s32.totalorder %s31, 0
      %p205 = por %p203, %p204
      %p206 = scmp.ne.s32.totalorder %s192, %s193
      %p207 = scmp.eq.s32.totalorder %s32, 1
      %p208 = por %p206, %p207
      %p210 = scmp.ne.s32.totalorder %s193, %s209
      %p211 = scmp.eq.s32.totalorder %s32, 0
      %p212 = por %p210, %p211
      %s213 = ssub.s32 %s34, %s41
      %p214 = scmp.eq.s32.totalorder %s213, 0
      %s216 = sadd.s32 %s215, 1
      %s217 = scalar_select %p214, %s215, %s216
      %p220 = pneg %p214
      %p221 = scmp.eq.s32.totalorder %s26, 1
      %p222 = por %p220, %p221
      %p223 = scmp.ne.s32.totalorder %s215, %s218
      %p224 = scmp.eq.s32.totalorder %s26, 0
      %p225 = por %p223, %p224
      %p226 = scmp.ne.s32.totalorder %s215, %s218
      %p227 = scmp.eq.s32.totalorder %s31, 1
      %p228 = por %p226, %p227
      %p229 = scmp.ne.s32.totalorder %s218, %s219
      %p230 = scmp.eq.s32.totalorder %s31, 0
      %p231 = por %p229, %p230
      %p232 = scmp.ne.s32.totalorder %s218, %s219
      %p233 = scmp.eq.s32.totalorder %s32, 1
      %p234 = por %p232, %p233
      %p236 = scmp.ne.s32.totalorder %s219, %s235
      %p237 = scmp.eq.s32.totalorder %s32, 0
      %p238 = por %p236, %p237
      %s239 = ssub.s32 %s34, %s41
      %p240 = scmp.eq.s32.totalorder %s239, 0
      %s242 = sadd.s32 %s241, 1
      %s243 = scalar_select %p240, %s241, %s242
      %p246 = pneg %p240
      %p247 = scmp.eq.s32.totalorder %s26, 1
      %p248 = por %p246, %p247
      %p249 = scmp.ne.s32.totalorder %s241, %s244
      %p250 = scmp.eq.s32.totalorder %s26, 0
      %p251 = por %p249, %p250
      %p252 = scmp.ne.s32.totalorder %s241, %s244
      %p253 = scmp.eq.s32.totalorder %s31, 1
      %p254 = por %p252, %p253
      %p255 = scmp.ne.s32.totalorder %s244, %s245
      %p256 = scmp.eq.s32.totalorder %s31, 0
      %p257 = por %p255, %p256
      %p258 = scmp.ne.s32.totalorder %s244, %s245
      %p259 = scmp.eq.s32.totalorder %s32, 1
      %p260 = por %p258, %p259
      %p262 = scmp.ne.s32.totalorder %s245, %s261
      %p263 = scmp.eq.s32.totalorder %s32, 0
      %p264 = por %p262, %p263
      %s265 = ssub.s32 %s34, %s41
      %p266 = scmp.eq.s32.totalorder %s265, 0
      %s268 = sadd.s32 %s267, 1
      %s269 = scalar_select %p266, %s267, %s268
      %p272 = pneg %p266
      %p273 = scmp.eq.s32.totalorder %s26, 1
      %p274 = por %p272, %p273
      %p275 = scmp.ne.s32.totalorder %s267, %s270
      %p276 = scmp.eq.s32.totalorder %s26, 0
      %p277 = por %p275, %p276
      %p278 = scmp.ne.s32.totalorder %s267, %s270
      %p279 = scmp.eq.s32.totalorder %s31, 1
      %p280 = por %p278, %p279
      %p281 = scmp.ne.s32.totalorder %s270, %s271
      %p282 = scmp.eq.s32.totalorder %s31, 0
      %p283 = por %p281, %p282
      %p284 = scmp.ne.s32.totalorder %s270, %s271
      %p285 = scmp.eq.s32.totalorder %s32, 1
      %p286 = por %p284, %p285
      %p288 = scmp.ne.s32.totalorder %s271, %s287
      %p289 = scmp.eq.s32.totalorder %s32, 0
      %p290 = por %p288, %p289
      %s291 = ssub.s32 %s34, %s41
      %p292 = scmp.eq.s32.totalorder %s291, 0
      %s294 = sadd.s32 %s293, 1
      %s295 = scalar_select %p292, %s293, %s294
      %p298 = pneg %p292
      %p299 = scmp.eq.s32.totalorder %s26, 1
      %p300 = por %p298, %p299
      %p301 = scmp.ne.s32.totalorder %s293, %s296
      %p302 = scmp.eq.s32.totalorder %s26, 0
      %p303 = por %p301, %p302
      %p304 = scmp.ne.s32.totalorder %s293, %s296
      %p305 = scmp.eq.s32.totalorder %s31, 1
      %p306 = por %p304, %p305
      %p307 = scmp.ne.s32.totalorder %s296, %s297
      %p308 = scmp.eq.s32.totalorder %s31, 0
      %p309 = por %p307, %p308
      %p310 = scmp.ne.s32.totalorder %s296, %s297
      %p311 = scmp.eq.s32.totalorder %s32, 1
      %p312 = por %p310, %p311
      %p314 = scmp.ne.s32.totalorder %s297, %s313
      %p315 = scmp.eq.s32.totalorder %s32, 0
      %p316 = por %p314, %p315
      %s318 = sadd.s32 %s317, 1
      %p321 = scmp.eq.s32.totalorder %s26, 1
      %p322 = scmp.ne.s32.totalorder %s317, %s319
      %p323 = scmp.eq.s32.totalorder %s26, 0
      %p324 = por %p322, %p323
      %p325 = scmp.ne.s32.totalorder %s317, %s319
      %p326 = scmp.eq.s32.totalorder %s31, 1
      %p327 = por %p325, %p326
      %p328 = scmp.ne.s32.totalorder %s319, %s320
      %p329 = scmp.eq.s32.totalorder %s31, 0
      %p330 = por %p328, %p329
      %p331 = scmp.ne.s32.totalorder %s319, %s320
      %p332 = scmp.eq.s32.totalorder %s32, 1
      %p333 = por %p331, %p332
      %p335 = scmp.ne.s32.totalorder %s320, %s334
      %p336 = scmp.eq.s32.totalorder %s32, 0
      %p337 = por %p335, %p336
      %s339 = sadd.s32 %s338, 1
      %p342 = scmp.eq.s32.totalorder %s26, 1
      %p343 = scmp.ne.s32.totalorder %s338, %s340
      %p344 = scmp.eq.s32.totalorder %s26, 0
      %p345 = por %p343, %p344
      %p346 = scmp.ne.s32.totalorder %s338, %s340
      %p347 = scmp.eq.s32.totalorder %s31, 1
      %p348 = por %p346, %p347
      %p349 = scmp.ne.s32.totalorder %s340, %s341
      %p350 = scmp.eq.s32.totalorder %s31, 0
      %p351 = por %p349, %p350
      %p352 = scmp.ne.s32.totalorder %s340, %s341
      %p353 = scmp.eq.s32.totalorder %s32, 1
      %p354 = por %p352, %p353
      %p356 = scmp.ne.s32.totalorder %s341, %s355
      %p357 = scmp.eq.s32.totalorder %s32, 0
      %p358 = por %p356, %p357
      %s360 = sadd.s32 %s359, 1
      %p363 = scmp.eq.s32.totalorder %s26, 1
      %p364 = scmp.ne.s32.totalorder %s359, %s361
      %p365 = scmp.eq.s32.totalorder %s26, 0
      %p366 = por %p364, %p365
      %p367 = scmp.ne.s32.totalorder %s359, %s361
      %p368 = scmp.eq.s32.totalorder %s31, 1
      %p369 = por %p367, %p368
      %p370 = scmp.ne.s32.totalorder %s361, %s362
      %p371 = scmp.eq.s32.totalorder %s31, 0
      %p372 = por %p370, %p371
      %p373 = scmp.ne.s32.totalorder %s361, %s362
      %p374 = scmp.eq.s32.totalorder %s32, 1
      %p375 = por %p373, %p374
      %p377 = scmp.ne.s32.totalorder %s362, %s376
      %p378 = scmp.eq.s32.totalorder %s32, 0
      %p379 = por %p377, %p378
      %s381 = sadd.s32 %s380, 1
      %p384 = scmp.eq.s32.totalorder %s26, 1
      %p385 = scmp.ne.s32.totalorder %s380, %s382
      %p386 = scmp.eq.s32.totalorder %s26, 0
      %p387 = por %p385, %p386
      %p388 = scmp.ne.s32.totalorder %s380, %s382
      %p389 = scmp.eq.s32.totalorder %s31, 1
      %p390 = por %p388, %p389
      %p391 = scmp.ne.s32.totalorder %s382, %s383
      %p392 = scmp.eq.s32.totalorder %s31, 0
      %p393 = por %p391, %p392
      %p394 = scmp.ne.s32.totalorder %s382, %s383
      %p395 = scmp.eq.s32.totalorder %s32, 1
      %p396 = por %p394, %p395
      %p398 = scmp.ne.s32.totalorder %s383, %s397
      %p399 = scmp.eq.s32.totalorder %s32, 0
      %p400 = por %p398, %p399
      %s402 = sadd.s32 %s401, 1
      %p405 = scmp.eq.s32.totalorder %s26, 1
      %p406 = scmp.ne.s32.totalorder %s401, %s403
      %p407 = scmp.eq.s32.totalorder %s26, 0
      %p408 = por %p406, %p407
      %p409 = scmp.ne.s32.totalorder %s401, %s403
      %p410 = scmp.eq.s32.totalorder %s31, 1
      %p411 = por %p409, %p410
      %p412 = scmp.ne.s32.totalorder %s403, %s404
      %p413 = scmp.eq.s32.totalorder %s31, 0
      %p414 = por %p412, %p413
      %p415 = scmp.ne.s32.totalorder %s403, %s404
      %p416 = scmp.eq.s32.totalorder %s32, 1
      %p417 = por %p415, %p416
      %p419 = scmp.ne.s32.totalorder %s404, %s418
      %p420 = scmp.eq.s32.totalorder %s32, 0
      %p421 = por %p419, %p420
      %s423 = sadd.s32 %s422, 1
      %p426 = scmp.eq.s32.totalorder %s26, 1
      %p427 = scmp.ne.s32.totalorder %s422, %s424
      %p428 = scmp.eq.s32.totalorder %s26, 0
      %p429 = por %p427, %p428
      %p430 = scmp.ne.s32.totalorder %s422, %s424
      %p431 = scmp.eq.s32.totalorder %s31, 1
      %p432 = por %p430, %p431
      %p433 = scmp.ne.s32.totalorder %s424, %s425
      %p434 = scmp.eq.s32.totalorder %s31, 0
      %p435 = por %p433, %p434
      %p436 = scmp.ne.s32.totalorder %s424, %s425
      %p437 = scmp.eq.s32.totalorder %s32, 1
      %p438 = por %p436, %p437
      %p440 = scmp.ne.s32.totalorder %s425, %s439
      %p441 = scmp.eq.s32.totalorder %s32, 0
      %p442 = por %p440, %p441
      %s444 = sadd.s32 %s443, 1
      %p447 = scmp.eq.s32.totalorder %s26, 1
      %p448 = scmp.ne.s32.totalorder %s443, %s445
      %p449 = scmp.eq.s32.totalorder %s26, 0
      %p450 = por %p448, %p449
      %p451 = scmp.ne.s32.totalorder %s443, %s445
      %p452 = scmp.eq.s32.totalorder %s31, 1
      %p453 = por %p451, %p452
      %p454 = scmp.ne.s32.totalorder %s445, %s446
      %p455 = scmp.eq.s32.totalorder %s31, 0
      %p456 = por %p454, %p455
      %p457 = scmp.ne.s32.totalorder %s445, %s446
      %p458 = scmp.eq.s32.totalorder %s32, 1
      %p459 = por %p457, %p458
      %p461 = scmp.ne.s32.totalorder %s446, %s460
      %p462 = scmp.eq.s32.totalorder %s32, 0
      %p463 = por %p461, %p462
      %s465 = sadd.s32 %s464, 1
      %p468 = scmp.eq.s32.totalorder %s26, 1
      %p469 = scmp.ne.s32.totalorder %s464, %s466
      %p470 = scmp.eq.s32.totalorder %s26, 0
      %p471 = por %p469, %p470
      %p472 = scmp.ne.s32.totalorder %s464, %s466
      %p473 = scmp.eq.s32.totalorder %s31, 1
      %p474 = por %p472, %p473
      %p475 = scmp.ne.s32.totalorder %s466, %s467
      %p476 = scmp.eq.s32.totalorder %s31, 0
      %p477 = por %p475, %p476
      %p478 = scmp.ne.s32.totalorder %s466, %s467
      %p479 = scmp.eq.s32.totalorder %s32, 1
      %p480 = por %p478, %p479
      %p482 = scmp.ne.s32.totalorder %s467, %s481
      %p483 = scmp.eq.s32.totalorder %s32, 0
      %p484 = por %p482, %p483
      %s485 = ssub.s32 %s33, %s45
      %p486 = scmp.eq.s32.totalorder %s485, 0
      %s488 = sadd.s32 %s487, 1
      %s489 = scalar_select %p486, %s487, %s488
      %p492 = pneg %p486
      %p493 = scmp.eq.s32.totalorder %s26, 1
      %p494 = por %p492, %p493
      %p495 = scmp.ne.s32.totalorder %s487, %s490
      %p496 = scmp.eq.s32.totalorder %s26, 0
      %p497 = por %p495, %p496
      %p498 = scmp.ne.s32.totalorder %s487, %s490
      %p499 = scmp.eq.s32.totalorder %s31, 1
      %p500 = por %p498, %p499
      %p501 = scmp.ne.s32.totalorder %s490, %s491
      %p502 = scmp.eq.s32.totalorder %s31, 0
      %p503 = por %p501, %p502
      %p504 = scmp.ne.s32.totalorder %s490, %s491
      %p505 = scmp.eq.s32.totalorder %s32, 1
      %p506 = por %p504, %p505
      %p508 = scmp.ne.s32.totalorder %s491, %s507
      %p509 = scmp.eq.s32.totalorder %s32, 0
      %p510 = por %p508, %p509
      %p511 = scmp.le.s32.totalorder 1, %s26
      %p512 = scmp.lt.s32.totalorder %s26, 3
      %p513 = pnand %p511, %p512
      %p514 = pneg %p513
      // Predicated region
      $region9: #{tpu_custom_call.1} parent=5 // pred_check
        _
      $region10: #{tpu_custom_call.1} parent=5 // pred_check_branch
        %516 = sbr.rel (%p513) target = $region12
      $region11: #{tpu_custom_call.1} parent=5 // pred_region
        %s517 = ssub.s32 %s26, 1
        // Predicated region
        $region13: #{tpu_custom_call.1} parent=11 // pred_check
          %p518 = pneg %p64
        $region14: #{tpu_custom_call.1} parent=11 // pred_check_branch
          %520 = sbr.rel (%p518) target = $region16
        $region15: #{tpu_custom_call.1} parent=11 // pred_region
          %s521 = smul.u32 4, %s35
          %p522 = scmp.lt.s32.totalorder %s521, 3
          %s523 = scalar_select %p522, %s521, 3
          %s524 = smul.addr %s523, 8
          %s525 = scalar_lea.vmem %s0, %s524
          %s526 = smul.u32 4, %s35
        $region16: #{tpu_custom_call.1} parent=11 // pred_fallthru
          _
        // Predicated region
        $region17: #{tpu_custom_call.1} parent=11 // pred_check
          %p527 = pneg %p85
        $region18: #{tpu_custom_call.1} parent=11 // pred_check_branch
          %529 = sbr.rel (%p527) target = $region20
        $region19: #{tpu_custom_call.1} parent=11 // pred_region
          _
        $region20: #{tpu_custom_call.1} parent=11 // pred_fallthru
          _
        // Predicated region
        $region21: #{tpu_custom_call.1} parent=11 // pred_check
          %p530 = pneg %p106
        $region22: #{tpu_custom_call.1} parent=11 // pred_check_branch
          %532 = sbr.rel (%p530) target = $region24
        $region23: #{tpu_custom_call.1} parent=11 // pred_region
          _
        $region24: #{tpu_custom_call.1} parent=11 // pred_fallthru
          _
        // Predicated region
        $region25: #{tpu_custom_call.1} parent=11 // pred_check
          %p533 = pneg %p127
        $region26: #{tpu_custom_call.1} parent=11 // pred_check_branch
          %535 = sbr.rel (%p533) target = $region28
        $region27: #{tpu_custom_call.1} parent=11 // pred_region
          _
        $region28: #{tpu_custom_call.1} parent=11 // pred_fallthru
          _
        // Predicated region
        $region29: #{tpu_custom_call.1} parent=11 // pred_check
          %p536 = pneg %p330
        $region30: #{tpu_custom_call.1} parent=11 // pred_check_branch
          %538 = sbr.rel (%p536) target = $region32
        $region31: #{tpu_custom_call.1} parent=11 // pred_region
          _
        $region32: #{tpu_custom_call.1} parent=11 // pred_fallthru
          _
        // Predicated region
        $region33: #{tpu_custom_call.1} parent=11 // pred_check
          %p539 = pneg %p351
        $region34: #{tpu_custom_call.1} parent=11 // pred_check_branch
          %541 = sbr.rel (%p539) target = $region36
        $region35: #{tpu_custom_call.1} parent=11 // pred_region
          _
        $region36: #{tpu_custom_call.1} parent=11 // pred_fallthru
          _
        // Predicated region
        $region37: #{tpu_custom_call.1} parent=11 // pred_check
          %p542 = pneg %p372
        $region38: #{tpu_custom_call.1} parent=11 // pred_check_branch
          %544 = sbr.rel (%p542) target = $region40
        $region39: #{tpu_custom_call.1} parent=11 // pred_region
          _
        $region40: #{tpu_custom_call.1} parent=11 // pred_fallthru
          _
        // Predicated region
        $region41: #{tpu_custom_call.1} parent=11 // pred_check
          %p545 = pneg %p393
        $region42: #{tpu_custom_call.1} parent=11 // pred_check_branch
          %547 = sbr.rel (%p545) target = $region44
        $region43: #{tpu_custom_call.1} parent=11 // pred_region
          _
        $region44: #{tpu_custom_call.1} parent=11 // pred_fallthru
          _
        // Predicated region
        $region45: #{tpu_custom_call.1} parent=11 // pred_check
          %p548 = pneg %p414
        $region46: #{tpu_custom_call.1} parent=11 // pred_check_branch
          %550 = sbr.rel (%p548) target = $region48
        $region47: #{tpu_custom_call.1} parent=11 // pred_region
          _
        $region48: #{tpu_custom_call.1} parent=11 // pred_fallthru
          _
        // Predicated region
        $region49: #{tpu_custom_call.1} parent=11 // pred_check
          %p551 = pneg %p435
        $region50: #{tpu_custom_call.1} parent=11 // pred_check_branch
          %553 = sbr.rel (%p551) target = $region52
        $region51: #{tpu_custom_call.1} parent=11 // pred_region
          _
        $region52: #{tpu_custom_call.1} parent=11 // pred_fallthru
          _
        // Predicated region
        $region53: #{tpu_custom_call.1} parent=11 // pred_check
          %p554 = pneg %p456
        $region54: #{tpu_custom_call.1} parent=11 // pred_check_branch
          %556 = sbr.rel (%p554) target = $region56
        $region55: #{tpu_custom_call.1} parent=11 // pred_region
          _
        $region56: #{tpu_custom_call.1} parent=11 // pred_fallthru
          _
        // Predicated region
        $region57: #{tpu_custom_call.1} parent=11 // pred_check
          %p557 = pneg %p477
        $region58: #{tpu_custom_call.1} parent=11 // pred_check_branch
          %559 = sbr.rel (%p557) target = $region60
        $region59: #{tpu_custom_call.1} parent=11 // pred_region
          _
        $region60: #{tpu_custom_call.1} parent=11 // pred_fallthru
          _
      $region12: #{tpu_custom_call.1} parent=5 // pred_fallthru
        _
      %p560 = scmp.lt.s32.totalorder %s26, 2
      // Predicated region
      $region61: #{tpu_custom_call.1} parent=5 // pred_check
        %p561 = pneg %p560
      $region62: #{tpu_custom_call.1} parent=5 // pred_check_branch
        %563 = sbr.rel (%p561) target = $region64
      $region63: #{tpu_custom_call.1} parent=5 // pred_region
        // Predicated region
        $region65: #{tpu_custom_call.1} parent=63 // pred_check
          %p564 = pneg %p147
        $region66: #{tpu_custom_call.1} parent=63 // pred_check_branch
          %566 = sbr.rel (%p564) target = $region68
        $region67: #{tpu_custom_call.1} parent=63 // pred_region
          %p567 = scmp.lt.s32.totalorder %s34, 1
          %s568 = scalar_select %p567, %s34, 1
          %s569 = smul.addr %s568, 8
          %s570 = scalar_lea.vmem %s4, %s569
        $region68: #{tpu_custom_call.1} parent=63 // pred_fallthru
          _
        // Predicated region
        $region69: #{tpu_custom_call.1} parent=63 // pred_check
          %p571 = pneg %p173
        $region70: #{tpu_custom_call.1} parent=63 // pred_check_branch
          %573 = sbr.rel (%p571) target = $region72
        $region71: #{tpu_custom_call.1} parent=63 // pred_region
          %p574 = scmp.lt.s32.totalorder %s34, 1
          %s575 = scalar_select %p574, %s34, 1
          %s576 = scalar_lea.vmem %s5, %s575
        $region72: #{tpu_custom_call.1} parent=63 // pred_fallthru
          _
        // Predicated region
        $region73: #{tpu_custom_call.1} parent=63 // pred_check
          %p577 = pneg %p199
        $region74: #{tpu_custom_call.1} parent=63 // pred_check_branch
          %579 = sbr.rel (%p577) target = $region76
        $region75: #{tpu_custom_call.1} parent=63 // pred_region
          %p580 = scmp.lt.s32.totalorder %s34, 1
          %s581 = scalar_select %p580, %s34, 1
          %s582 = scalar_lea.vmem %s6, %s581
        $region76: #{tpu_custom_call.1} parent=63 // pred_fallthru
          _
        // Predicated region
        $region77: #{tpu_custom_call.1} parent=63 // pred_check
          %p583 = pneg %p225
        $region78: #{tpu_custom_call.1} parent=63 // pred_check_branch
          %585 = sbr.rel (%p583) target = $region80
        $region79: #{tpu_custom_call.1} parent=63 // pred_region
          %p586 = scmp.lt.s32.totalorder %s34, 1
          %s587 = scalar_select %p586, %s34, 1
          %s588 = smul.addr %s587, 4
          %s589 = smul.addr %s588, 4
          %s590 = scalar_lea.vmem %s7, %s589
        $region80: #{tpu_custom_call.1} parent=63 // pred_fallthru
          _
        // Predicated region
        $region81: #{tpu_custom_call.1} parent=63 // pred_check
          %p591 = pneg %p251
        $region82: #{tpu_custom_call.1} parent=63 // pred_check_branch
          %593 = sbr.rel (%p591) target = $region84
        $region83: #{tpu_custom_call.1} parent=63 // pred_region
          %p594 = scmp.lt.s32.totalorder %s34, 1
          %s595 = scalar_select %p594, %s34, 1
          %s596 = smul.addr %s595, 4
          %s597 = smul.addr %s596, 4
          %s598 = scalar_lea.vmem %s8, %s597
        $region84: #{tpu_custom_call.1} parent=63 // pred_fallthru
          _
        // Predicated region
        $region85: #{tpu_custom_call.1} parent=63 // pred_check
          %p599 = pneg %p277
        $region86: #{tpu_custom_call.1} parent=63 // pred_check_branch
          %601 = sbr.rel (%p599) target = $region88
        $region87: #{tpu_custom_call.1} parent=63 // pred_region
          %p602 = scmp.lt.s32.totalorder %s34, 1
          %s603 = scalar_select %p602, %s34, 1
          %s604 = smul.addr %s603, 4
          %s605 = smul.addr %s604, 4
          %s606 = scalar_lea.vmem %s9, %s605
        $region88: #{tpu_custom_call.1} parent=63 // pred_fallthru
          _
        // Predicated region
        $region89: #{tpu_custom_call.1} parent=63 // pred_check
          %p607 = pneg %p303
        $region90: #{tpu_custom_call.1} parent=63 // pred_check_branch
          %609 = sbr.rel (%p607) target = $region92
        $region91: #{tpu_custom_call.1} parent=63 // pred_region
          %p610 = scmp.lt.s32.totalorder %s34, 1
          %s611 = scalar_select %p610, %s34, 1
          %s612 = smul.addr %s611, 16
          %s613 = smul.addr %s612, 4
          %s614 = scalar_lea.vmem %s10, %s613
        $region92: #{tpu_custom_call.1} parent=63 // pred_fallthru
          _
      $region64: #{tpu_custom_call.1} parent=5 // pred_fallthru
        _
      %p615 = scmp.le.s32.totalorder 1, %s26
      %p616 = scmp.lt.s32.totalorder %s26, 3
      %p617 = pnand %p615, %p616
      %p618 = pneg %p617
      // Predicated region
      $region93: #{tpu_custom_call.1} parent=5 // pred_check
        _
      $region94: #{tpu_custom_call.1} parent=5 // pred_check_branch
        %620 = sbr.rel (%p617) target = $region96
      $region95: #{tpu_custom_call.1} parent=5 // pred_region
        %s621 = ssub.s32 %s26, 1
        %s622 = smul.u32 4, %s35
        %p623 = scmp.lt.s32.totalorder %s622, 3
        %s624 = scalar_select %p623, %s622, 3
        %s625 = smul.addr %s624, 8
        %s626 = scalar_lea.vmem %s0, %s625
        %p627 = pneg %p64
        %p628 = pneg %p61
        %p629 = pneg %p85
        %p630 = pneg %p82
        %p631 = pneg %p106
        %p632 = pneg %p103
        %p633 = pneg %p127
        %p634 = pneg %p124
        %p635 = scmp.lt.s32.totalorder %s36, 1
        %s636 = scalar_select %p635, %s36, 1
        %s637 = smul.addr %s636, 8
        %s638 = scalar_lea.vmem %s4, %s637
        %p639 = pneg %p153
        %p640 = pneg %p150
        %p641 = scmp.lt.s32.totalorder %s36, 1
        %s642 = scalar_select %p641, %s36, 1
        %s643 = scalar_lea.vmem %s5, %s642
        %p644 = pneg %p179
        %p645 = pneg %p176
        %p646 = scmp.lt.s32.totalorder %s36, 1
        %s647 = scalar_select %p646, %s36, 1
        %s648 = scalar_lea.vmem %s6, %s647
        %p649 = pneg %p205
        %p650 = pneg %p202
        %p651 = scmp.lt.s32.totalorder %s36, 1
        %s652 = scalar_select %p651, %s36, 1
        %s653 = smul.addr %s652, 4
        %s654 = smul.addr %s653, 4
        %s655 = scalar_lea.vmem %s7, %s654
        %p656 = pneg %p231
        %p657 = pneg %p228
        %p658 = scmp.lt.s32.totalorder %s36, 1
        %s659 = scalar_select %p658, %s36, 1
        %s660 = smul.addr %s659, 4
        %s661 = smul.addr %s660, 4
        %s662 = scalar_lea.vmem %s8, %s661
        %p663 = pneg %p257
        %p664 = pneg %p254
        %p665 = scmp.lt.s32.totalorder %s36, 1
        %s666 = scalar_select %p665, %s36, 1
        %s667 = smul.addr %s666, 4
        %s668 = smul.addr %s667, 4
        %s669 = scalar_lea.vmem %s9, %s668
        %p670 = pneg %p283
        %p671 = pneg %p280
        %p672 = scmp.lt.s32.totalorder %s36, 1
        %s673 = scalar_select %p672, %s36, 1
        %s674 = smul.addr %s673, 16
        %s675 = smul.addr %s674, 4
        %s676 = scalar_lea.vmem %s10, %s675
        %p677 = pneg %p309
        %p678 = pneg %p306
        %p679 = pneg %p330
        %p680 = pneg %p327
        %p681 = pneg %p351
        %p682 = pneg %p348
        %p683 = pneg %p372
        %p684 = pneg %p369
        %p685 = pneg %p393
        %p686 = pneg %p390
        %p687 = pneg %p414
        %p688 = pneg %p411
        %p689 = pneg %p435
        %p690 = pneg %p432
        %p691 = pneg %p456
        %p692 = pneg %p453
        %p693 = pneg %p477
        %p694 = pneg %p474
        %p695 = pneg %p503
        %p696 = pneg %p500
        %s697 = smul.u32 4, %s35
        %p698 = scmp.lt.s32.totalorder %s697, 3
        %s699 = scalar_select %p698, %s697, 3
        %s700 = smul.addr %s699, 8
        %s701 = scalar_lea.vmem %s0, %s700
        %s702 = smul.u32 4, %s35
        %p703 = scmp.lt.s32.totalorder %s36, 1
        %s704 = scalar_select %p703, %s36, 1
        %s705 = smul.addr %s704, 8
        %s706 = scalar_lea.vmem %s4, %s705
        %p707 = scmp.lt.s32.totalorder %s36, 1
        %s708 = scalar_select %p707, %s36, 1
        %s709 = scalar_lea.vmem %s5, %s708
        %p710 = scmp.lt.s32.totalorder %s36, 1
        %s711 = scalar_select %p710, %s36, 1
        %s712 = scalar_lea.vmem %s6, %s711
        %p713 = scmp.lt.s32.totalorder %s36, 1
        %s714 = scalar_select %p713, %s36, 1
        %s715 = smul.addr %s714, 4
        %s716 = smul.addr %s715, 4
        %s717 = scalar_lea.vmem %s7, %s716
        %p718 = scmp.lt.s32.totalorder %s36, 1
        %s719 = scalar_select %p718, %s36, 1
        %s720 = smul.addr %s719, 4
        %s721 = smul.addr %s720, 4
        %s722 = scalar_lea.vmem %s8, %s721
        %p723 = scmp.lt.s32.totalorder %s36, 1
        %s724 = scalar_select %p723, %s36, 1
        %s725 = smul.addr %s724, 4
        %s726 = smul.addr %s725, 4
        %s727 = scalar_lea.vmem %s9, %s726
        %p728 = scmp.lt.s32.totalorder %s36, 1
        %s729 = scalar_select %p728, %s36, 1
        %s730 = smul.addr %s729, 16
        %s731 = smul.addr %s730, 4
        %s732 = scalar_lea.vmem %s10, %s731
        %p734 = scmp.eq.s32.totalorder %s36, 0
        // Predicated region
        $region97: #{tpu_custom_call.1} parent=95 // pred_check
          %p735 = pneg %p734
        $region98: #{tpu_custom_call.1} parent=95 // pred_check_branch
          %737 = sbr.rel (%p735) target = $region100
        $region99: #{tpu_custom_call.1} parent=95 // pred_region
          %v738 = vld [vmem:[%s701] sm:$0xff]
          %v739 = vld [vmem:[%s701 + $0x8] sm:$0xff]
          %v740 = vld [vmem:[%s701 + $0x10] sm:$0xff]
          %v741 = vld [vmem:[%s701 + $0x18] sm:$0xff]
          %v742 = vld [vmem:[%s1] sm:$0xff]
          %v743 = vld [vmem:[%s1 + $0x8] sm:$0xff]
          %v744 = vld [vmem:[%s1 + $0x10] sm:$0xff]
          %v745 = vld [vmem:[%s1 + $0x18] sm:$0xff]
          %v746 = vld [vmem:[%s1 + $0x20] sm:$0xff]
          %v747 = vld [vmem:[%s1 + $0x28] sm:$0xff]
          %v748 = vld [vmem:[%s2] sm:$0x1]
          %v750 = vlaneseq
          %v751 = vshrl.u32 %v750, 7
          %v752 = vsub.s32 0, %v751
          %v753 = vrot.slane %v748, %v752
          %vm755 = vcmask 392192
          %v757 = vsel %vm755, %v738, 0
          %v760 = vsel %vm755, %v739, 0
          %v763 = vsel %vm755, %v740, 0
          %v766 = vsel %vm755, %v741, 0
          %768 = vmatprep.subr.mxu0 0.0
          %769 = vmatpush1.msra.mxu0 0.0
          %770 = vmatprep.subr.mxu0 0.0
          %771 = vmatpush1.msra.mxu0 0.0
          %772 = vmatprep.subr.mxu0 0.0
          %773 = vmatpush1.msra.mxu0 0.0
          %774 = vmatprep.subr.mxu0 0.0
          %775 = vmatpush1.msra.mxu0 0.0
          %776 = vmatprep.subr.mxu0 0.0
          %777 = vmatpush1.msra.mxu0 0.0
          %778 = vmatprep.subr.mxu0 0.0
          %779 = vmatpush1.msra.mxu0 0.0
          %780 = vmatprep.subr.mxu0 0.0
          %781 = vmatpush1.msra.mxu0 0.0
          %782 = vmatprep.subr.mxu0 0.0
          %783 = vmatpush1.msra.mxu0 0.0
          %784 = vmatprep.subr.mxu0 0.0
          %785 = vmatpush1.msra.mxu0 0.0
          %786 = vmatprep.subr.mxu0 0.0
          %787 = vmatpush1.msra.mxu0 0.0
          %788 = vmatprep.subr.mxu0 0.0
          %789 = vmatpush1.msra.mxu0 %v747
          %790 = vmatprep.subr.mxu0 0.0
          %791 = vmatpush1.msra.mxu0 %v746
          %792 = vmatprep.subr.mxu0 0.0
          %793 = vmatpush1.msra.mxu0 %v745
          %794 = vmatprep.subr.mxu0 0.0
          %795 = vmatpush1.msra.mxu0 %v744
          %796 = vmatprep.subr.mxu0 0.0
          %797 = vmatpush1.msra.mxu0 %v743
          %798 = vmatprep.subr.mxu0 0.0
          %799 = vmatpush1.msra.mxu0 %v742
          %800 = vmatprep.subr.mxu0 0.0
          %801 = vmatpush2.msra.mxu0 0.0
          %802 = vmatprep.subr.mxu0 0.0
          %803 = vmatpush2.msra.mxu0 0.0
          %804 = vmatprep.subr.mxu0 0.0
          %805 = vmatpush2.msra.mxu0 0.0
          %806 = vmatprep.subr.mxu0 0.0
          %807 = vmatpush2.msra.mxu0 0.0
          %808 = vmatprep.subr.mxu0 0.0
          %809 = vmatpush2.msra.mxu0 0.0
          %810 = vmatprep.subr.mxu0 0.0
          %811 = vmatpush2.msra.mxu0 0.0
          %812 = vmatprep.subr.mxu0 0.0
          %813 = vmatpush2.msra.mxu0 0.0
          %814 = vmatprep.subr.mxu0 0.0
          %815 = vmatpush2.msra.mxu0 0.0
          %816 = vmatprep.subr.mxu0 0.0
          %817 = vmatpush2.msra.mxu0 0.0
          %818 = vmatprep.subr.mxu0 0.0
          %819 = vmatpush2.msra.mxu0 0.0
          %820 = vmatprep.subr.mxu0 0.0
          %821 = vmatpush2.msra.mxu0 0.0
          %822 = vmatprep.subr.mxu0 0.0
          %823 = vmatpush2.msra.mxu0 0.0
          %824 = vmatprep.subr.mxu0 0.0
          %825 = vmatpush2.msra.mxu0 0.0
          %826 = vmatprep.subr.mxu0 0.0
          %827 = vmatpush2.msra.mxu0 0.0
          %828 = vmatprep.subr.mxu0 0.0
          %829 = vmatpush2.msra.mxu0 0.0
          %830 = vmatprep.subr.mxu0 0.0
          %831 = vmatpush2.msra.mxu0 0.0
          %832 = vmatprep.mubr.f32.mxu0 0.0
          %833 = vmatmul.mubr.f32.gmra.mxu0 %v757
          %v834 = vpop.f32.mrf.mxu0
          %v835 = vadd.f32 %v753, %v834
          %v836 = vpop.f32.mrf.mxu0
          %837 = vmatprep.mubr.f32.mxu0 0.0
          %838 = vmatmul.mubr.f32.gmra.mxu0 %v760
          %v839 = vpop.f32.mrf.mxu0
          %v840 = vadd.f32 %v753, %v839
          %v841 = vpop.f32.mrf.mxu0
          %842 = vmatprep.mubr.f32.mxu0 0.0
          %843 = vmatmul.mubr.f32.gmra.mxu0 %v763
          %v844 = vpop.f32.mrf.mxu0
          %v845 = vadd.f32 %v753, %v844
          %v846 = vpop.f32.mrf.mxu0
          %847 = vmatprep.mubr.f32.mxu0 0.0
          %848 = vmatmul.mubr.f32.gmra.mxu0 %v766
          %v849 = vpop.f32.mrf.mxu0
          %v850 = vadd.f32 %v753, %v849
          %v851 = vpop.f32.mrf.mxu0
          %852 = vdwg.mxu0
          %v853 = vld [vmem:[%s3] sm:$0xff]
          %v854 = vld [vmem:[%s3 + $0x8] sm:$0xff]
          %v855 = vadd.f32 %v835, %v853
          %v856 = vadd.f32 %v840, %v854
          %v857 = vadd.f32 %v845, %v853
          %v858 = vadd.f32 %v850, %v854
          %vm859 = vcmask 261120
          %860 = vst.msk [vmem:[#allocation2] sm:$0xff] %vm859, %v855
          %861 = vst.msk [vmem:[#allocation2 + $0x8] sm:$0xff] %vm859, %v856
          %862 = vst.msk [vmem:[#allocation2 + $0x10] sm:$0xff] %vm859, %v857
          %863 = vst.msk [vmem:[#allocation2 + $0x18] sm:$0xff] %vm859, %v858
        $region100: #{tpu_custom_call.1} parent=95 // pred_fallthru
          _
        %v864 = vld [vmem:[#allocation2] sm:$0xff]
        %v865 = vld [vmem:[#allocation2 + $0x8] sm:$0xff]
        %v866 = vld [vmem:[#allocation2 + $0x10] sm:$0xff]
        %v867 = vld [vmem:[#allocation2 + $0x18] sm:$0xff]
        %v868 = vld [vmem:[%s706] sm:$0xff]
        %vm869 = vcmask 261120
        %v870 = vsel %vm869, %v864, 0.0
        %871 = vadd.xlane.f32.xlu0 %v870
        %v872 = vpop.xlane.xlu0 %871
        %v873 = vsel %vm869, %v865, 0.0
        %874 = vadd.xlane.f32.xlu0 %v873
        %v875 = vpop.xlane.xlu0 %874
        %v876 = vsel %vm869, %v866, 0.0
        %877 = vadd.xlane.f32.xlu0 %v876
        %v878 = vpop.xlane.xlu0 %877
        %v879 = vsel %vm869, %v867, 0.0
        %880 = vadd.xlane.f32.xlu0 %v879
        %v881 = vpop.xlane.xlu0 %880
        %v882 = vrcp.pop 32.0
        %v883 = vmul.f32 %v872, %v882
        %v884 = vmul.f32 %v875, %v882
        %v885 = vmul.f32 %v878, %v882
        %v886 = vmul.f32 %v881, %v882
        %v887 = vsub.f32 %v864, %v883
        %v888 = vsub.f32 %v865, %v884
        %v889 = vsub.f32 %v866, %v885
        %v890 = vsub.f32 %v867, %v886
        %v891 = vmul.f32 %v887, %v887
        %v892 = vmul.f32 %v888, %v888
        %v893 = vmul.f32 %v889, %v889
        %v894 = vmul.f32 %v890, %v890
        %v895 = vsel %vm869, %v891, 0.0
        %896 = vadd.xlane.f32.xlu0 %v895
        %v897 = vpop.xlane.xlu0 %896
        %v898 = vsel %vm869, %v892, 0.0
        %899 = vadd.xlane.f32.xlu0 %v898
        %v900 = vpop.xlane.xlu0 %899
        %v901 = vsel %vm869, %v893, 0.0
        %902 = vadd.xlane.f32.xlu0 %v901
        %v903 = vpop.xlane.xlu0 %902
        %v904 = vsel %vm869, %v894, 0.0
        %905 = vadd.xlane.f32.xlu0 %v904
        %v906 = vpop.xlane.xlu0 %905
        %v907 = vmul.f32 %v897, %v882
        %v908 = vmul.f32 %v900, %v882
        %v909 = vmul.f32 %v903, %v882
        %v910 = vmul.f32 %v906, %v882
        %v911 = vadd.f32 %v907, 1e-06
        %v912 = vadd.f32 %v908, 1e-06
        %v913 = vadd.f32 %v909, 1e-06
        %v914 = vadd.f32 %v910, 1e-06
        %v915 = vrsqrt.pop %v911
        %v916 = vrsqrt.pop %v912
        %v917 = vrsqrt.pop %v913
        %v918 = vrsqrt.pop %v914
        %v919 = vmul.f32 %v887, %v915
        %v920 = vmul.f32 %v888, %v916
        %v921 = vmul.f32 %v889, %v917
        %v922 = vmul.f32 %v890, %v918
        %v923 = vlaneseq
        %v924 = vshrl.u32 %v923, 7
        %v925 = vsub.s32 0, %v924
        %v926 = vrot.slane %v868, %v925
        %v927 = vmul.f32 %v919, %v926
        %v928 = vmul.f32 %v920, %v926
        %v929 = vmul.f32 %v921, %v926
        %v930 = vmul.f32 %v922, %v926
        %v931 = vlaneseq
        %v932 = vshrl.u32 %v931, 7
        %v933 = vsub.s32 1, %v932
        %v934 = vrot.slane %v868, %v933
        %v935 = vadd.f32 %v927, %v934
        %v936 = vadd.f32 %v928, %v934
        %v937 = vadd.f32 %v929, %v934
        %v938 = vadd.f32 %v930, %v934
        %v939 = vpack.c.bf16 %v936, %v935
        %v940 = vpack.c.bf16 %v938, %v937
        %v941 = vld [vmem:[%s717] sm:$0xf]
        %v942 = vld [vmem:[%s717 + $0x4] sm:$0xf]
        %v943 = vld [vmem:[%s717 + $0x8] sm:$0xf]
        %v944 = vld [vmem:[%s717 + $0xc] sm:$0xf]
        %v945 = vld [vmem:[%s709] sm:$0x1]
        %v947 = vlaneseq
        %v948 = vshrl.u32 %v947, 7
        %v949 = vsub.s32 0, %v948
        %v950 = vrot.slane %v945, %v949
        %v956 = vunpack.c.l.b16 %v941
        %v957 = vunpack.c.l.b16 %v942
        %v958 = vunpack.c.l.b16 %v943
        %v959 = vunpack.c.l.b16 %v944
        %v960 = vpack.c.b16 %v957, %v956
        %v961 = vpack.c.b16 %v959, %v958
        %v965 = vsel %vm869, %v939, 0
        %v968 = vsel %vm869, %v940, 0
        %970 = vmatprep.subr.bf16.mxu0 0
        %971 = vmatpush1.bf16.msra.mxu0 0
        %972 = vmatprep.subr.bf16.mxu0 0
        %973 = vmatpush1.bf16.msra.mxu0 0
        %974 = vmatprep.subr.bf16.mxu0 0
        %975 = vmatpush1.bf16.msra.mxu0 0
        %976 = vmatprep.subr.bf16.mxu0 0
        %977 = vmatpush1.bf16.msra.mxu0 0
        %978 = vmatprep.subr.bf16.mxu0 0
        %979 = vmatpush1.bf16.msra.mxu0 0
        %980 = vmatprep.subr.bf16.mxu0 0
        %981 = vmatpush1.bf16.msra.mxu0 0
        %982 = vmatprep.subr.bf16.mxu0 0
        %983 = vmatpush1.bf16.msra.mxu0 %v961
        %984 = vmatprep.subr.bf16.mxu0 0
        %985 = vmatpush1.bf16.msra.mxu0 %v960
        %986 = vmatprep.subr.bf16.mxu0 0
        %987 = vmatpush2.bf16.msra.mxu0 0
        %988 = vmatprep.subr.bf16.mxu0 0
        %989 = vmatpush2.bf16.msra.mxu0 0
        %990 = vmatprep.subr.bf16.mxu0 0
        %991 = vmatpush2.bf16.msra.mxu0 0
        %992 = vmatprep.subr.bf16.mxu0 0
        %993 = vmatpush2.bf16.msra.mxu0 0
        %994 = vmatprep.subr.bf16.mxu0 0
        %995 = vmatpush2.bf16.msra.mxu0 0
        %996 = vmatprep.subr.bf16.mxu0 0
        %997 = vmatpush2.bf16.msra.mxu0 0
        %998 = vmatprep.subr.bf16.mxu0 0
        %999 = vmatpush2.bf16.msra.mxu0 0
        %1000 = vmatprep.subr.bf16.mxu0 0
        %1001 = vmatpush2.bf16.msra.mxu0 0
        %1002 = vmatprep.mubr.bf16.mxu0 0
        %1003 = vmatmul.mubr.bf16.gmra.mxu0 %v965
        %v1004 = vpop.f32.mrf.mxu0
        %v1005 = vadd.f32 %v950, %v1004
        %v1006 = vpop.f32.mrf.mxu0
        %v1007 = vpop.f32.mrf.mxu0
        %v1008 = vadd.f32 %v950, %v1007
        %v1009 = vpop.f32.mrf.mxu0
        %1010 = vmatprep.mubr.bf16.mxu0 0
        %1011 = vmatmul.mubr.bf16.gmra.mxu0 %v968
        %v1012 = vpop.f32.mrf.mxu0
        %v1013 = vadd.f32 %v950, %v1012
        %v1014 = vpop.f32.mrf.mxu0
        %v1015 = vpop.f32.mrf.mxu0
        %v1016 = vadd.f32 %v950, %v1015
        %v1017 = vpop.f32.mrf.mxu0
        %1018 = vdwg.mxu0
        %v1019 = vmul.f32 %v1005, 0.25
        %v1020 = vmul.f32 %v1008, 0.25
        %v1021 = vmul.f32 %v1013, 0.25
        %v1022 = vmul.f32 %v1016, 0.25
        %v1023 = vpack.c.bf16 %v1020, %v1019
        %v1024 = vpack.c.bf16 %v1022, %v1021
        %v1025 = vpack.c.bf16 %v1008, %v1005
        %v1026 = vpack.c.bf16 %v1016, %v1013
        %1028 = vrot.lane.b32.xlu0 %v1025, 96
        %v1029 = vpop.permute.xlu0 %1028
        %vm1030 = vcmask 130048
        %v1032 = vsel %vm1030, %v1023, 0
        %v1035 = vsel %vm1030, %v1029, 0
        %1037 = vmatprep.subr.bf16.mxu0 0
        %1038 = vmatpush1.bf16.xpose.msra.mxu0 0
        %1039 = vmatprep.subr.bf16.mxu0 0
        %1040 = vmatpush1.bf16.xpose.msra.mxu0 0
        %1041 = vmatprep.subr.bf16.mxu0 0
        %1042 = vmatpush1.bf16.xpose.msra.mxu0 0
        %1043 = vmatprep.subr.bf16.mxu0 0
        %1044 = vmatpush1.bf16.xpose.msra.mxu0 0
        %1045 = vmatprep.subr.bf16.mxu0 0
        %1046 = vmatpush1.bf16.xpose.msra.mxu0 0
        %1047 = vmatprep.subr.bf16.mxu0 0
        %1048 = vmatpush1.bf16.xpose.msra.mxu0 0
        %1049 = vmatprep.subr.bf16.mxu0 0
        %1050 = vmatpush1.bf16.xpose.msra.mxu0 0
        %1051 = vmatprep.subr.bf16.mxu0 0
        %1052 = vmatpush1.bf16.xpose.msra.mxu0 %v1035
        %1053 = vmatprep.subr.bf16.mxu0 0
        %1054 = vmatpush2.bf16.xpose.msra.mxu0 0
        %1055 = vmatprep.subr.bf16.mxu0 0
        %1056 = vmatpush2.bf16.xpose.msra.mxu0 0
        %1057 = vmatprep.subr.bf16.mxu0 0
        %1058 = vmatpush2.bf16.xpose.msra.mxu0 0
        %1059 = vmatprep.subr.bf16.mxu0 0
        %1060 = vmatpush2.bf16.xpose.msra.mxu0 0
        %1061 = vmatprep.subr.bf16.mxu0 0
        %1062 = vmatpush2.bf16.xpose.msra.mxu0 0
        %1063 = vmatprep.subr.bf16.mxu0 0
        %1064 = vmatpush2.bf16.xpose.msra.mxu0 0
        %1065 = vmatprep.subr.bf16.mxu0 0
        %1066 = vmatpush2.bf16.xpose.msra.mxu0 0
        %1067 = vmatprep.subr.bf16.mxu0 0
        %1068 = vmatpush2.bf16.xpose.msra.mxu0 0
        %1069 = vmatprep.mubr.bf16.mxu0 0
        %1070 = vmatmul.mubr.bf16.gmra.mxu0 %v1032
        %v1071 = vpop.f32.mrf.mxu0
        %v1072 = vadd.f32 0.0, %v1071
        %v1073 = vpop.f32.mrf.mxu0
        %v1074 = vpop.f32.mrf.mxu0
        %v1075 = vadd.f32 0.0, %v1074
        %v1076 = vpop.f32.mrf.mxu0
        %1077 = vdwg.mxu0
        %1079 = vrot.lane.b32.xlu0 %v1026, 96
        %v1080 = vpop.permute.xlu0 %1079
        %v1082 = vsel %vm1030, %v1024, 0
        %v1085 = vsel %vm1030, %v1080, 0
        %1087 = vmatprep.subr.bf16.mxu0 0
        %1088 = vmatpush1.bf16.xpose.msra.mxu0 0
        %1089 = vmatprep.subr.bf16.mxu0 0
        %1090 = vmatpush1.bf16.xpose.msra.mxu0 0
        %1091 = vmatprep.subr.bf16.mxu0 0
        %1092 = vmatpush1.bf16.xpose.msra.mxu0 0
        %1093 = vmatprep.subr.bf16.mxu0 0
        %1094 = vmatpush1.bf16.xpose.msra.mxu0 0
        %1095 = vmatprep.subr.bf16.mxu0 0
        %1096 = vmatpush1.bf16.xpose.msra.mxu0 0
        %1097 = vmatprep.subr.bf16.mxu0 0
        %1098 = vmatpush1.bf16.xpose.msra.mxu0 0
        %1099 = vmatprep.subr.bf16.mxu0 0
        %1100 = vmatpush1.bf16.xpose.msra.mxu0 0
        %1101 = vmatprep.subr.bf16.mxu0 0
        %1102 = vmatpush1.bf16.xpose.msra.mxu0 %v1085
        %1103 = vmatprep.subr.bf16.mxu0 0
        %1104 = vmatpush2.bf16.xpose.msra.mxu0 0
        %1105 = vmatprep.subr.bf16.mxu0 0
        %1106 = vmatpush2.bf16.xpose.msra.mxu0 0
        %1107 = vmatprep.subr.bf16.mxu0 0
        %1108 = vmatpush2.bf16.xpose.msra.mxu0 0
        %1109 = vmatprep.subr.bf16.mxu0 0
        %1110 = vmatpush2.bf16.xpose.msra.mxu0 0
        %1111 = vmatprep.subr.bf16.mxu0 0
        %1112 = vmatpush2.bf16.xpose.msra.mxu0 0
        %1113 = vmatprep.subr.bf16.mxu0 0
        %1114 = vmatpush2.bf16.xpose.msra.mxu0 0
        %1115 = vmatprep.subr.bf16.mxu0 0
        %1116 = vmatpush2.bf16.xpose.msra.mxu0 0
        %1117 = vmatprep.subr.bf16.mxu0 0
        %1118 = vmatpush2.bf16.xpose.msra.mxu0 0
        %1119 = vmatprep.mubr.bf16.mxu0 0
        %1120 = vmatmul.mubr.bf16.gmra.mxu0 %v1082
        %v1121 = vpop.f32.mrf.mxu0
        %v1122 = vadd.f32 0.0, %v1121
        %v1123 = vpop.f32.mrf.mxu0
        %v1124 = vpop.f32.mrf.mxu0
        %v1125 = vadd.f32 0.0, %v1124
        %v1126 = vpop.f32.mrf.mxu0
        %1127 = vdwg.mxu0
        %v1128 = vsel %vm1030, %v1072, -inf
        %1129 = vmax.xlane.f32.xlu0 %v1128
        %v1130 = vpop.xlane.xlu0 %1129
        %v1131 = vsel %vm1030, %v1075, -inf
        %1132 = vmax.xlane.f32.xlu0 %v1131
        %v1133 = vpop.xlane.xlu0 %1132
        %v1134 = vsel %vm1030, %v1122, -inf
        %1135 = vmax.xlane.f32.xlu0 %v1134
        %v1136 = vpop.xlane.xlu0 %1135
        %v1137 = vsel %vm1030, %v1125, -inf
        %1138 = vmax.xlane.f32.xlu0 %v1137
        %v1139 = vpop.xlane.xlu0 %1138
        %v1140 = vsub.f32 %v1072, %v1130
        %v1141 = vsub.f32 %v1075, %v1133
        %v1142 = vsub.f32 %v1122, %v1136
        %v1143 = vsub.f32 %v1125, %v1139
        %v1144 = vmul.f32 %v1140, 1.442695
        %v1145 = vpow.pop %v1144
        %v1146 = vmul.f32 %v1141, 1.442695
        %v1147 = vpow.pop %v1146
        %v1148 = vmul.f32 %v1142, 1.442695
        %v1149 = vpow.pop %v1148
        %v1150 = vmul.f32 %v1143, 1.442695
        %v1151 = vpow.pop %v1150
        %v1152 = vsel %vm1030, %v1145, 0.0
        %1153 = vadd.xlane.f32.xlu0 %v1152
        %v1154 = vpop.xlane.xlu0 %1153
        %v1155 = vsel %vm1030, %v1147, 0.0
        %1156 = vadd.xlane.f32.xlu0 %v1155
        %v1157 = vpop.xlane.xlu0 %1156
        %v1158 = vsel %vm1030, %v1149, 0.0
        %1159 = vadd.xlane.f32.xlu0 %v1158
        %v1160 = vpop.xlane.xlu0 %1159
        %v1161 = vsel %vm1030, %v1151, 0.0
        %1162 = vadd.xlane.f32.xlu0 %v1161
        %v1163 = vpop.xlane.xlu0 %1162
        %v1164 = vrcp.pop %v1154
        %v1165 = vrcp.pop %v1157
        %v1166 = vrcp.pop %v1160
        %v1167 = vrcp.pop %v1163
        %v1168 = vmul.f32 %v1145, %v1164
        %v1169 = vmul.f32 %v1147, %v1165
        %v1170 = vmul.f32 %v1149, %v1166
        %v1171 = vmul.f32 %v1151, %v1167
        %v1172 = vpack.c.bf16 %v1169, %v1168
        %v1173 = vpack.c.bf16 %v1171, %v1170
        %1174 = vrot.lane.b32.xlu0 %v1025, 64
        %v1175 = vpop.permute.xlu0 %1174
        %v1178 = vsel %vm1030, %v1172, 0
        %1180 = vmatprep.subr.bf16.mxu0 0
        %1181 = vmatpush1.bf16.msra.mxu0 0
        %1182 = vmatprep.subr.bf16.mxu0 0
        %1183 = vmatpush1.bf16.msra.mxu0 0
        %1184 = vmatprep.subr.bf16.mxu0 0
        %1185 = vmatpush1.bf16.msra.mxu0 0
        %1186 = vmatprep.subr.bf16.mxu0 0
        %1187 = vmatpush1.bf16.msra.mxu0 0
        %1188 = vmatprep.subr.bf16.mxu0 0
        %1189 = vmatpush1.bf16.msra.mxu0 0
        %1190 = vmatprep.subr.bf16.mxu0 0
        %1191 = vmatpush1.bf16.msra.mxu0 0
        %1192 = vmatprep.subr.bf16.mxu0 0
        %1193 = vmatpush1.bf16.msra.mxu0 0
        %1194 = vmatprep.subr.bf16.mxu0 0
        %1195 = vmatpush1.bf16.msra.mxu0 %v1175
        %1196 = vmatprep.subr.bf16.mxu0 0
        %1197 = vmatpush2.bf16.msra.mxu0 0
        %1198 = vmatprep.subr.bf16.mxu0 0
        %1199 = vmatpush2.bf16.msra.mxu0 0
        %1200 = vmatprep.subr.bf16.mxu0 0
        %1201 = vmatpush2.bf16.msra.mxu0 0
        %1202 = vmatprep.subr.bf16.mxu0 0
        %1203 = vmatpush2.bf16.msra.mxu0 0
        %1204 = vmatprep.subr.bf16.mxu0 0
        %1205 = vmatpush2.bf16.msra.mxu0 0
        %1206 = vmatprep.subr.bf16.mxu0 0
        %1207 = vmatpush2.bf16.msra.mxu0 0
        %1208 = vmatprep.subr.bf16.mxu0 0
        %1209 = vmatpush2.bf16.msra.mxu0 0
        %1210 = vmatprep.subr.bf16.mxu0 0
        %1211 = vmatpush2.bf16.msra.mxu0 0
        %1212 = vmatprep.mubr.bf16.mxu0 0
        %1213 = vmatmul.mubr.bf16.gmra.mxu0 %v1178
        %v1214 = vpop.f32.mrf.mxu0
        %v1215 = vadd.f32 0.0, %v1214
        %v1216 = vpop.f32.mrf.mxu0
        %v1217 = vpop.f32.mrf.mxu0
        %v1218 = vadd.f32 0.0, %v1217
        %v1219 = vpop.f32.mrf.mxu0
        %1220 = vdwg.mxu0
        %1221 = vrot.lane.b32.xlu0 %v1026, 64
        %v1222 = vpop.permute.xlu0 %1221
        %v1225 = vsel %vm1030, %v1173, 0
        %1227 = vmatprep.subr.bf16.mxu0 0
        %1228 = vmatpush1.bf16.msra.mxu0 0
        %1229 = vmatprep.subr.bf16.mxu0 0
        %1230 = vmatpush1.bf16.msra.mxu0 0
        %1231 = vmatprep.subr.bf16.mxu0 0
        %1232 = vmatpush1.bf16.msra.mxu0 0
        %1233 = vmatprep.subr.bf16.mxu0 0
        %1234 = vmatpush1.bf16.msra.mxu0 0
        %1235 = vmatprep.subr.bf16.mxu0 0
        %1236 = vmatpush1.bf16.msra.mxu0 0
        %1237 = vmatprep.subr.bf16.mxu0 0
        %1238 = vmatpush1.bf16.msra.mxu0 0
        %1239 = vmatprep.subr.bf16.mxu0 0
        %1240 = vmatpush1.bf16.msra.mxu0 0
        %1241 = vmatprep.subr.bf16.mxu0 0
        %1242 = vmatpush1.bf16.msra.mxu0 %v1222
        %1243 = vmatprep.subr.bf16.mxu0 0
        %1244 = vmatpush2.bf16.msra.mxu0 0
        %1245 = vmatprep.subr.bf16.mxu0 0
        %1246 = vmatpush2.bf16.msra.mxu0 0
        %1247 = vmatprep.subr.bf16.mxu0 0
        %1248 = vmatpush2.bf16.msra.mxu0 0
        %1249 = vmatprep.subr.bf16.mxu0 0
        %1250 = vmatpush2.bf16.msra.mxu0 0
        %1251 = vmatprep.subr.bf16.mxu0 0
        %1252 = vmatpush2.bf16.msra.mxu0 0
        %1253 = vmatprep.subr.bf16.mxu0 0
        %1254 = vmatpush2.bf16.msra.mxu0 0
        %1255 = vmatprep.subr.bf16.mxu0 0
        %1256 = vmatpush2.bf16.msra.mxu0 0
        %1257 = vmatprep.subr.bf16.mxu0 0
        %1258 = vmatpush2.bf16.msra.mxu0 0
        %1259 = vmatprep.mubr.bf16.mxu0 0
        %1260 = vmatmul.mubr.bf16.gmra.mxu0 %v1225
        %v1261 = vpop.f32.mrf.mxu0
        %v1262 = vadd.f32 0.0, %v1261
        %v1263 = vpop.f32.mrf.mxu0
        %v1264 = vpop.f32.mrf.mxu0
        %v1265 = vadd.f32 0.0, %v1264
        %v1266 = vpop.f32.mrf.mxu0
        %1267 = vdwg.mxu0
        %1269 = vrot.lane.b32.xlu0 %v1023, 112
        %v1270 = vpop.permute.xlu0 %1269
        %1271 = vrot.lane.b32.xlu0 %v1025, 80
        %v1272 = vpop.permute.xlu0 %1271
        %v1274 = vsel %vm1030, %v1270, 0
        %v1277 = vsel %vm1030, %v1272, 0
        %1279 = vmatprep.subr.bf16.mxu0 0
        %1280 = vmatpush1.bf16.xpose.msra.mxu0 0
        %1281 = vmatprep.subr.bf16.mxu0 0
        %1282 = vmatpush1.bf16.xpose.msra.mxu0 0
        %1283 = vmatprep.subr.bf16.mxu0 0
        %1284 = vmatpush1.bf16.xpose.msra.mxu0 0
        %1285 = vmatprep.subr.bf16.mxu0 0
        %1286 = vmatpush1.bf16.xpose.msra.mxu0 0
        %1287 = vmatprep.subr.bf16.mxu0 0
        %1288 = vmatpush1.bf16.xpose.msra.mxu0 0
        %1289 = vmatprep.subr.bf16.mxu0 0
        %1290 = vmatpush1.bf16.xpose.msra.mxu0 0
        %1291 = vmatprep.subr.bf16.mxu0 0
        %1292 = vmatpush1.bf16.xpose.msra.mxu0 0
        %1293 = vmatprep.subr.bf16.mxu0 0
        %1294 = vmatpush1.bf16.xpose.msra.mxu0 %v1277
        %1295 = vmatprep.subr.bf16.mxu0 0
        %1296 = vmatpush2.bf16.xpose.msra.mxu0 0
        %1297 = vmatprep.subr.bf16.mxu0 0
        %1298 = vmatpush2.bf16.xpose.msra.mxu0 0
        %1299 = vmatprep.subr.bf16.mxu0 0
        %1300 = vmatpush2.bf16.xpose.msra.mxu0 0
        %1301 = vmatprep.subr.bf16.mxu0 0
        %1302 = vmatpush2.bf16.xpose.msra.mxu0 0
        %1303 = vmatprep.subr.bf16.mxu0 0
        %1304 = vmatpush2.bf16.xpose.msra.mxu0 0
        %1305 = vmatprep.subr.bf16.mxu0 0
        %1306 = vmatpush2.bf16.xpose.msra.mxu0 0
        %1307 = vmatprep.subr.bf16.mxu0 0
        %1308 = vmatpush2.bf16.xpose.msra.mxu0 0
        %1309 = vmatprep.subr.bf16.mxu0 0
        %1310 = vmatpush2.bf16.xpose.msra.mxu0 0
        %1311 = vmatprep.mubr.bf16.mxu0 0
        %1312 = vmatmul.mubr.bf16.gmra.mxu0 %v1274
        %v1313 = vpop.f32.mrf.mxu0
        %v1314 = vadd.f32 0.0, %v1313
        %v1315 = vpop.f32.mrf.mxu0
        %v1316 = vpop.f32.mrf.mxu0
        %v1317 = vadd.f32 0.0, %v1316
        %v1318 = vpop.f32.mrf.mxu0
        %1319 = vdwg.mxu0
        %1321 = vrot.lane.b32.xlu0 %v1024, 112
        %v1322 = vpop.permute.xlu0 %1321
        %1323 = vrot.lane.b32.xlu0 %v1026, 80
        %v1324 = vpop.permute.xlu0 %1323
        %v1326 = vsel %vm1030, %v1322, 0
        %v1329 = vsel %vm1030, %v1324, 0
        %1331 = vmatprep.subr.bf16.mxu0 0
        %1332 = vmatpush1.bf16.xpose.msra.mxu0 0
        %1333 = vmatprep.subr.bf16.mxu0 0
        %1334 = vmatpush1.bf16.xpose.msra.mxu0 0
        %1335 = vmatprep.subr.bf16.mxu0 0
        %1336 = vmatpush1.bf16.xpose.msra.mxu0 0
        %1337 = vmatprep.subr.bf16.mxu0 0
        %1338 = vmatpush1.bf16.xpose.msra.mxu0 0
        %1339 = vmatprep.subr.bf16.mxu0 0
        %1340 = vmatpush1.bf16.xpose.msra.mxu0 0
        %1341 = vmatprep.subr.bf16.mxu0 0
        %1342 = vmatpush1.bf16.xpose.msra.mxu0 0
        %1343 = vmatprep.subr.bf16.mxu0 0
        %1344 = vmatpush1.bf16.xpose.msra.mxu0 0
        %1345 = vmatprep.subr.bf16.mxu0 0
        %1346 = vmatpush1.bf16.xpose.msra.mxu0 %v1329
        %1347 = vmatprep.subr.bf16.mxu0 0
        %1348 = vmatpush2.bf16.xpose.msra.mxu0 0
        %1349 = vmatprep.subr.bf16.mxu0 0
        %1350 = vmatpush2.bf16.xpose.msra.mxu0 0
        %1351 = vmatprep.subr.bf16.mxu0 0
        %1352 = vmatpush2.bf16.xpose.msra.mxu0 0
        %1353 = vmatprep.subr.bf16.mxu0 0
        %1354 = vmatpush2.bf16.xpose.msra.mxu0 0
        %1355 = vmatprep.subr.bf16.mxu0 0
        %1356 = vmatpush2.bf16.xpose.msra.mxu0 0
        %1357 = vmatprep.subr.bf16.mxu0 0
        %1358 = vmatpush2.bf16.xpose.msra.mxu0 0
        %1359 = vmatprep.subr.bf16.mxu0 0
        %1360 = vmatpush2.bf16.xpose.msra.mxu0 0
        %1361 = vmatprep.subr.bf16.mxu0 0
        %1362 = vmatpush2.bf16.xpose.msra.mxu0 0
        %1363 = vmatprep.mubr.bf16.mxu0 0
        %1364 = vmatmul.mubr.bf16.gmra.mxu0 %v1326
        %v1365 = vpop.f32.mrf.mxu0
        %v1366 = vadd.f32 0.0, %v1365
        %v1367 = vpop.f32.mrf.mxu0
        %v1368 = vpop.f32.mrf.mxu0
        %v1369 = vadd.f32 0.0, %v1368
        %v1370 = vpop.f32.mrf.mxu0
        %1371 = vdwg.mxu0
        %v1372 = vsel %vm1030, %v1314, -inf
        %1373 = vmax.xlane.f32.xlu0 %v1372
        %v1374 = vpop.xlane.xlu0 %1373
        %v1375 = vsel %vm1030, %v1317, -inf
        %1376 = vmax.xlane.f32.xlu0 %v1375
        %v1377 = vpop.xlane.xlu0 %1376
        %v1378 = vsel %vm1030, %v1366, -inf
        %1379 = vmax.xlane.f32.xlu0 %v1378
        %v1380 = vpop.xlane.xlu0 %1379
        %v1381 = vsel %vm1030, %v1369, -inf
        %1382 = vmax.xlane.f32.xlu0 %v1381
        %v1383 = vpop.xlane.xlu0 %1382
        %v1384 = vsub.f32 %v1314, %v1374
        %v1385 = vsub.f32 %v1317, %v1377
        %v1386 = vsub.f32 %v1366, %v1380
        %v1387 = vsub.f32 %v1369, %v1383
        %v1388 = vmul.f32 %v1384, 1.442695
        %v1389 = vpow.pop %v1388
        %v1390 = vmul.f32 %v1385, 1.442695
        %v1391 = vpow.pop %v1390
        %v1392 = vmul.f32 %v1386, 1.442695
        %v1393 = vpow.pop %v1392
        %v1394 = vmul.f32 %v1387, 1.442695
        %v1395 = vpow.pop %v1394
        %v1396 = vsel %vm1030, %v1389, 0.0
        %1397 = vadd.xlane.f32.xlu0 %v1396
        %v1398 = vpop.xlane.xlu0 %1397
        %v1399 = vsel %vm1030, %v1391, 0.0
        %1400 = vadd.xlane.f32.xlu0 %v1399
        %v1401 = vpop.xlane.xlu0 %1400
        %v1402 = vsel %vm1030, %v1393, 0.0
        %1403 = vadd.xlane.f32.xlu0 %v1402
        %v1404 = vpop.xlane.xlu0 %1403
        %v1405 = vsel %vm1030, %v1395, 0.0
        %1406 = vadd.xlane.f32.xlu0 %v1405
        %v1407 = vpop.xlane.xlu0 %1406
        %v1408 = vrcp.pop %v1398
        %v1409 = vrcp.pop %v1401
        %v1410 = vrcp.pop %v1404
        %v1411 = vrcp.pop %v1407
        %v1412 = vmul.f32 %v1389, %v1408
        %v1413 = vmul.f32 %v1391, %v1409
        %v1414 = vmul.f32 %v1393, %v1410
        %v1415 = vmul.f32 %v1395, %v1411
        %v1416 = vpack.c.bf16 %v1413, %v1412
        %v1417 = vpack.c.bf16 %v1415, %v1414
        %1418 = vrot.lane.b32.xlu0 %v1025, 48
        %v1419 = vpop.permute.xlu0 %1418
        %v1422 = vsel %vm1030, %v1416, 0
        %1424 = vmatprep.subr.bf16.mxu0 0
        %1425 = vmatpush1.bf16.msra.mxu0 0
        %1426 = vmatprep.subr.bf16.mxu0 0
        %1427 = vmatpush1.bf16.msra.mxu0 0
        %1428 = vmatprep.subr.bf16.mxu0 0
        %1429 = vmatpush1.bf16.msra.mxu0 0
        %1430 = vmatprep.subr.bf16.mxu0 0
        %1431 = vmatpush1.bf16.msra.mxu0 0
        %1432 = vmatprep.subr.bf16.mxu0 0
        %1433 = vmatpush1.bf16.msra.mxu0 0
        %1434 = vmatprep.subr.bf16.mxu0 0
        %1435 = vmatpush1.bf16.msra.mxu0 0
        %1436 = vmatprep.subr.bf16.mxu0 0
        %1437 = vmatpush1.bf16.msra.mxu0 0
        %1438 = vmatprep.subr.bf16.mxu0 0
        %1439 = vmatpush1.bf16.msra.mxu0 %v1419
        %1440 = vmatprep.subr.bf16.mxu0 0
        %1441 = vmatpush2.bf16.msra.mxu0 0
        %1442 = vmatprep.subr.bf16.mxu0 0
        %1443 = vmatpush2.bf16.msra.mxu0 0
        %1444 = vmatprep.subr.bf16.mxu0 0
        %1445 = vmatpush2.bf16.msra.mxu0 0
        %1446 = vmatprep.subr.bf16.mxu0 0
        %1447 = vmatpush2.bf16.msra.mxu0 0
        %1448 = vmatprep.subr.bf16.mxu0 0
        %1449 = vmatpush2.bf16.msra.mxu0 0
        %1450 = vmatprep.subr.bf16.mxu0 0
        %1451 = vmatpush2.bf16.msra.mxu0 0
        %1452 = vmatprep.subr.bf16.mxu0 0
        %1453 = vmatpush2.bf16.msra.mxu0 0
        %1454 = vmatprep.subr.bf16.mxu0 0
        %1455 = vmatpush2.bf16.msra.mxu0 0
        %1456 = vmatprep.mubr.bf16.mxu0 0
        %1457 = vmatmul.mubr.bf16.gmra.mxu0 %v1422
        %v1458 = vpop.f32.mrf.mxu0
        %v1459 = vadd.f32 0.0, %v1458
        %v1460 = vpop.f32.mrf.mxu0
        %v1461 = vpop.f32.mrf.mxu0
        %v1462 = vadd.f32 0.0, %v1461
        %v1463 = vpop.f32.mrf.mxu0
        %1464 = vdwg.mxu0
        %1465 = vrot.lane.b32.xlu0 %v1026, 48
        %v1466 = vpop.permute.xlu0 %1465
        %v1469 = vsel %vm1030, %v1417, 0
        %1471 = vmatprep.subr.bf16.mxu0 0
        %1472 = vmatpush1.bf16.msra.mxu0 0
        %1473 = vmatprep.subr.bf16.mxu0 0
        %1474 = vmatpush1.bf16.msra.mxu0 0
        %1475 = vmatprep.subr.bf16.mxu0 0
        %1476 = vmatpush1.bf16.msra.mxu0 0
        %1477 = vmatprep.subr.bf16.mxu0 0
        %1478 = vmatpush1.bf16.msra.mxu0 0
        %1479 = vmatprep.subr.bf16.mxu0 0
        %1480 = vmatpush1.bf16.msra.mxu0 0
        %1481 = vmatprep.subr.bf16.mxu0 0
        %1482 = vmatpush1.bf16.msra.mxu0 0
        %1483 = vmatprep.subr.bf16.mxu0 0
        %1484 = vmatpush1.bf16.msra.mxu0 0
        %1485 = vmatprep.subr.bf16.mxu0 0
        %1486 = vmatpush1.bf16.msra.mxu0 %v1466
        %1487 = vmatprep.subr.bf16.mxu0 0
        %1488 = vmatpush2.bf16.msra.mxu0 0
        %1489 = vmatprep.subr.bf16.mxu0 0
        %1490 = vmatpush2.bf16.msra.mxu0 0
        %1491 = vmatprep.subr.bf16.mxu0 0
        %1492 = vmatpush2.bf16.msra.mxu0 0
        %1493 = vmatprep.subr.bf16.mxu0 0
        %1494 = vmatpush2.bf16.msra.mxu0 0
        %1495 = vmatprep.subr.bf16.mxu0 0
        %1496 = vmatpush2.bf16.msra.mxu0 0
        %1497 = vmatprep.subr.bf16.mxu0 0
        %1498 = vmatpush2.bf16.msra.mxu0 0
        %1499 = vmatprep.subr.bf16.mxu0 0
        %1500 = vmatpush2.bf16.msra.mxu0 0
        %1501 = vmatprep.subr.bf16.mxu0 0
        %1502 = vmatpush2.bf16.msra.mxu0 0
        %1503 = vmatprep.mubr.bf16.mxu0 0
        %1504 = vmatmul.mubr.bf16.gmra.mxu0 %v1469
        %v1505 = vpop.f32.mrf.mxu0
        %v1506 = vadd.f32 0.0, %v1505
        %v1507 = vpop.f32.mrf.mxu0
        %v1508 = vpop.f32.mrf.mxu0
        %v1509 = vadd.f32 0.0, %v1508
        %v1510 = vpop.f32.mrf.mxu0
        %1511 = vdwg.mxu0
        %1516 = vrot.lane.b32.xlu0 %v1459, 16
        %v1517 = vpop.permute.xlu0 %1516
        %1518 = vrot.lane.b32.xlu0 %v1462, 16
        %v1519 = vpop.permute.xlu0 %1518
        %1520 = vrot.lane.b32.xlu0 %v1506, 16
        %v1521 = vpop.permute.xlu0 %1520
        %1522 = vrot.lane.b32.xlu0 %v1509, 16
        %v1523 = vpop.permute.xlu0 %1522
        %v1528 = vsel %vm1030, %v1215, %v1517
        %v1529 = vsel %vm1030, %v1218, %v1519
        %v1530 = vsel %vm1030, %v1262, %v1521
        %v1531 = vsel %vm1030, %v1265, %v1523
        %v1532 = vpack.c.bf16 %v1529, %v1528
        %v1533 = vpack.c.bf16 %v1531, %v1530
        %v1534 = vld [vmem:[%s722] sm:$0xf]
        %v1535 = vld [vmem:[%s722 + $0x4] sm:$0xf]
        %v1536 = vld [vmem:[%s722 + $0x8] sm:$0xf]
        %v1537 = vld [vmem:[%s722 + $0xc] sm:$0xf]
        %v1538 = vlaneseq
        %v1539 = vshrl.u32 %v1538, 7
        %v1540 = vsub.s32 2, %v1539
        %v1541 = vrot.slane %v868, %v1540
        %v1546 = vunpack.c.l.b16 %v1534
        %v1547 = vunpack.c.l.b16 %v1535
        %v1548 = vunpack.c.l.b16 %v1536
        %v1549 = vunpack.c.l.b16 %v1537
        %v1550 = vpack.c.b16 %v1547, %v1546
        %v1551 = vpack.c.b16 %v1549, %v1548
        %v1555 = vsel %vm869, %v1532, 0
        %v1558 = vsel %vm869, %v1533, 0
        %1560 = vmatprep.subr.bf16.mxu0 0
        %1561 = vmatpush1.bf16.msra.mxu0 0
        %1562 = vmatprep.subr.bf16.mxu0 0
        %1563 = vmatpush1.bf16.msra.mxu0 0
        %1564 = vmatprep.subr.bf16.mxu0 0
        %1565 = vmatpush1.bf16.msra.mxu0 0
        %1566 = vmatprep.subr.bf16.mxu0 0
        %1567 = vmatpush1.bf16.msra.mxu0 0
        %1568 = vmatprep.subr.bf16.mxu0 0
        %1569 = vmatpush1.bf16.msra.mxu0 0
        %1570 = vmatprep.subr.bf16.mxu0 0
        %1571 = vmatpush1.bf16.msra.mxu0 0
        %1572 = vmatprep.subr.bf16.mxu0 0
        %1573 = vmatpush1.bf16.msra.mxu0 %v1551
        %1574 = vmatprep.subr.bf16.mxu0 0
        %1575 = vmatpush1.bf16.msra.mxu0 %v1550
        %1576 = vmatprep.subr.bf16.mxu0 0
        %1577 = vmatpush2.bf16.msra.mxu0 0
        %1578 = vmatprep.subr.bf16.mxu0 0
        %1579 = vmatpush2.bf16.msra.mxu0 0
        %1580 = vmatprep.subr.bf16.mxu0 0
        %1581 = vmatpush2.bf16.msra.mxu0 0
        %1582 = vmatprep.subr.bf16.mxu0 0
        %1583 = vmatpush2.bf16.msra.mxu0 0
        %1584 = vmatprep.subr.bf16.mxu0 0
        %1585 = vmatpush2.bf16.msra.mxu0 0
        %1586 = vmatprep.subr.bf16.mxu0 0
        %1587 = vmatpush2.bf16.msra.mxu0 0
        %1588 = vmatprep.subr.bf16.mxu0 0
        %1589 = vmatpush2.bf16.msra.mxu0 0
        %1590 = vmatprep.subr.bf16.mxu0 0
        %1591 = vmatpush2.bf16.msra.mxu0 0
        %1592 = vmatprep.mubr.bf16.mxu0 0
        %1593 = vmatmul.mubr.bf16.gmra.mxu0 %v1555
        %v1594 = vpop.f32.mrf.mxu0
        %v1595 = vadd.f32 %v1541, %v1594
        %v1596 = vpop.f32.mrf.mxu0
        %v1597 = vpop.f32.mrf.mxu0
        %v1598 = vadd.f32 %v1541, %v1597
        %v1599 = vpop.f32.mrf.mxu0
        %1600 = vmatprep.mubr.bf16.mxu0 0
        %1601 = vmatmul.mubr.bf16.gmra.mxu0 %v1558
        %v1602 = vpop.f32.mrf.mxu0
        %v1603 = vadd.f32 %v1541, %v1602
        %v1604 = vpop.f32.mrf.mxu0
        %v1605 = vpop.f32.mrf.mxu0
        %v1606 = vadd.f32 %v1541, %v1605
        %v1607 = vpop.f32.mrf.mxu0
        %1608 = vdwg.mxu0
        %v1609 = vlaneseq
        %v1610 = vshrl.u32 %v1609, 7
        %v1611 = vsub.s32 3, %v1610
        %v1612 = vrot.slane %v868, %v1611
        %v1613 = vmul.f32 %v1612, %v1595
        %v1614 = vmul.f32 %v1612, %v1598
        %v1615 = vmul.f32 %v1612, %v1603
        %v1616 = vmul.f32 %v1612, %v1606
        %v1617 = vadd.f32 %v864, %v1613
        %v1618 = vadd.f32 %v865, %v1614
        %v1619 = vadd.f32 %v866, %v1615
        %v1620 = vadd.f32 %v867, %v1616
        %v1621 = vsel %vm869, %v1617, 0.0
        %1622 = vadd.xlane.f32.xlu0 %v1621
        %v1623 = vpop.xlane.xlu0 %1622
        %v1624 = vsel %vm869, %v1618, 0.0
        %1625 = vadd.xlane.f32.xlu0 %v1624
        %v1626 = vpop.xlane.xlu0 %1625
        %v1627 = vsel %vm869, %v1619, 0.0
        %1628 = vadd.xlane.f32.xlu0 %v1627
        %v1629 = vpop.xlane.xlu0 %1628
        %v1630 = vsel %vm869, %v1620, 0.0
        %1631 = vadd.xlane.f32.xlu0 %v1630
        %v1632 = vpop.xlane.xlu0 %1631
        %v1633 = vmul.f32 %v1623, %v882
        %v1634 = vmul.f32 %v1626, %v882
        %v1635 = vmul.f32 %v1629, %v882
        %v1636 = vmul.f32 %v1632, %v882
        %v1637 = vsub.f32 %v1617, %v1633
        %v1638 = vsub.f32 %v1618, %v1634
        %v1639 = vsub.f32 %v1619, %v1635
        %v1640 = vsub.f32 %v1620, %v1636
        %v1641 = vmul.f32 %v1637, %v1637
        %v1642 = vmul.f32 %v1638, %v1638
        %v1643 = vmul.f32 %v1639, %v1639
        %v1644 = vmul.f32 %v1640, %v1640
        %v1645 = vsel %vm869, %v1641, 0.0
        %1646 = vadd.xlane.f32.xlu0 %v1645
        %v1647 = vpop.xlane.xlu0 %1646
        %v1648 = vsel %vm869, %v1642, 0.0
        %1649 = vadd.xlane.f32.xlu0 %v1648
        %v1650 = vpop.xlane.xlu0 %1649
        %v1651 = vsel %vm869, %v1643, 0.0
        %1652 = vadd.xlane.f32.xlu0 %v1651
        %v1653 = vpop.xlane.xlu0 %1652
        %v1654 = vsel %vm869, %v1644, 0.0
        %1655 = vadd.xlane.f32.xlu0 %v1654
        %v1656 = vpop.xlane.xlu0 %1655
        %v1657 = vmul.f32 %v1647, %v882
        %v1658 = vmul.f32 %v1650, %v882
        %v1659 = vmul.f32 %v1653, %v882
        %v1660 = vmul.f32 %v1656, %v882
        %v1661 = vadd.f32 %v1657, 1e-06
        %v1662 = vadd.f32 %v1658, 1e-06
        %v1663 = vadd.f32 %v1659, 1e-06
        %v1664 = vadd.f32 %v1660, 1e-06
        %v1665 = vrsqrt.pop %v1661
        %v1666 = vrsqrt.pop %v1662
        %v1667 = vrsqrt.pop %v1663
        %v1668 = vrsqrt.pop %v1664
        %v1669 = vmul.f32 %v1637, %v1665
        %v1670 = vmul.f32 %v1638, %v1666
        %v1671 = vmul.f32 %v1639, %v1667
        %v1672 = vmul.f32 %v1640, %v1668
        %v1673 = vlaneseq
        %v1674 = vshrl.u32 %v1673, 7
        %v1675 = vsub.s32 4, %v1674
        %v1676 = vrot.slane %v868, %v1675
        %v1677 = vmul.f32 %v1669, %v1676
        %v1678 = vmul.f32 %v1670, %v1676
        %v1679 = vmul.f32 %v1671, %v1676
        %v1680 = vmul.f32 %v1672, %v1676
        %v1681 = vlaneseq
        %v1682 = vshrl.u32 %v1681, 7
        %v1683 = vsub.s32 5, %v1682
        %v1684 = vrot.slane %v868, %v1683
        %v1685 = vadd.f32 %v1677, %v1684
        %v1686 = vadd.f32 %v1678, %v1684
        %v1687 = vadd.f32 %v1679, %v1684
        %v1688 = vadd.f32 %v1680, %v1684
        %v1689 = vpack.c.bf16 %v1686, %v1685
        %v1690 = vpack.c.bf16 %v1688, %v1687
        %v1691 = vld [vmem:[%s727] sm:$0xf]
        %v1692 = vld [vmem:[%s727 + $0x4] sm:$0xf]
        %v1693 = vld [vmem:[%s727 + $0x8] sm:$0xf]
        %v1694 = vld [vmem:[%s727 + $0xc] sm:$0xf]
        %v1695 = vld [vmem:[%s712] sm:$0x1]
        %v1697 = vlaneseq
        %v1698 = vshrl.u32 %v1697, 7
        %v1699 = vsub.s32 0, %v1698
        %v1700 = vrot.slane %v1695, %v1699
        %v1706 = vunpack.c.l.b16 %v1691
        %v1707 = vunpack.c.l.b16 %v1692
        %v1708 = vunpack.c.l.b16 %v1693
        %v1709 = vunpack.c.l.b16 %v1694
        %v1710 = vpack.c.b16 %v1707, %v1706
        %v1711 = vpack.c.b16 %v1709, %v1708
        %v1715 = vsel %vm869, %v1689, 0
        %v1718 = vsel %vm869, %v1690, 0
        %1720 = vmatprep.subr.bf16.mxu0 0
        %1721 = vmatpush1.bf16.msra.mxu0 0
        %1722 = vmatprep.subr.bf16.mxu0 0
        %1723 = vmatpush1.bf16.msra.mxu0 0
        %1724 = vmatprep.subr.bf16.mxu0 0
        %1725 = vmatpush1.bf16.msra.mxu0 0
        %1726 = vmatprep.subr.bf16.mxu0 0
        %1727 = vmatpush1.bf16.msra.mxu0 0
        %1728 = vmatprep.subr.bf16.mxu0 0
        %1729 = vmatpush1.bf16.msra.mxu0 0
        %1730 = vmatprep.subr.bf16.mxu0 0
        %1731 = vmatpush1.bf16.msra.mxu0 0
        %1732 = vmatprep.subr.bf16.mxu0 0
        %1733 = vmatpush1.bf16.msra.mxu0 %v1711
        %1734 = vmatprep.subr.bf16.mxu0 0
        %1735 = vmatpush1.bf16.msra.mxu0 %v1710
        %1736 = vmatprep.subr.bf16.mxu0 0
        %1737 = vmatpush2.bf16.msra.mxu0 0
        %1738 = vmatprep.subr.bf16.mxu0 0
        %1739 = vmatpush2.bf16.msra.mxu0 0
        %1740 = vmatprep.subr.bf16.mxu0 0
        %1741 = vmatpush2.bf16.msra.mxu0 0
        %1742 = vmatprep.subr.bf16.mxu0 0
        %1743 = vmatpush2.bf16.msra.mxu0 0
        %1744 = vmatprep.subr.bf16.mxu0 0
        %1745 = vmatpush2.bf16.msra.mxu0 0
        %1746 = vmatprep.subr.bf16.mxu0 0
        %1747 = vmatpush2.bf16.msra.mxu0 0
        %1748 = vmatprep.subr.bf16.mxu0 0
        %1749 = vmatpush2.bf16.msra.mxu0 0
        %1750 = vmatprep.subr.bf16.mxu0 0
        %1751 = vmatpush2.bf16.msra.mxu0 0
        %1752 = vmatprep.mubr.bf16.mxu0 0
        %1753 = vmatmul.mubr.bf16.gmra.mxu0 %v1715
        %v1754 = vpop.f32.mrf.mxu0
        %v1755 = vadd.f32 %v1700, %v1754
        %v1756 = vpop.f32.mrf.mxu0
        %v1757 = vpop.f32.mrf.mxu0
        %v1758 = vadd.f32 %v1700, %v1757
        %v1759 = vpop.f32.mrf.mxu0
        %1760 = vmatprep.mubr.bf16.mxu0 0
        %1761 = vmatmul.mubr.bf16.gmra.mxu0 %v1718
        %v1762 = vpop.f32.mrf.mxu0
        %v1763 = vadd.f32 %v1700, %v1762
        %v1764 = vpop.f32.mrf.mxu0
        %v1765 = vpop.f32.mrf.mxu0
        %v1766 = vadd.f32 %v1700, %v1765
        %v1767 = vpop.f32.mrf.mxu0
        %1768 = vdwg.mxu0
        %v1769 = vmul.f32 %v1755, %v1755
        %v1770 = vmul.f32 %v1758, %v1758
        %v1771 = vmul.f32 %v1763, %v1763
        %v1772 = vmul.f32 %v1766, %v1766
        %v1773 = vmul.f32 %v1755, %v1769
        %v1774 = vmul.f32 %v1758, %v1770
        %v1775 = vmul.f32 %v1763, %v1771
        %v1776 = vmul.f32 %v1766, %v1772
        %v1777 = vmul.f32 %v1773, 0.044715
        %v1778 = vmul.f32 %v1774, 0.044715
        %v1779 = vmul.f32 %v1775, 0.044715
        %v1780 = vmul.f32 %v1776, 0.044715
        %v1781 = vadd.f32 %v1755, %v1777
        %v1782 = vadd.f32 %v1758, %v1778
        %v1783 = vadd.f32 %v1763, %v1779
        %v1784 = vadd.f32 %v1766, %v1780
        %v1785 = vmul.f32 %v1781, 0.7978846
        %v1786 = vmul.f32 %v1782, 0.7978846
        %v1787 = vmul.f32 %v1783, 0.7978846
        %v1788 = vmul.f32 %v1784, 0.7978846
        %v1789 = vtanh.pop %v1785
        %v1790 = vtanh.pop %v1786
        %v1791 = vtanh.pop %v1787
        %v1792 = vtanh.pop %v1788
        %v1793 = vadd.f32 %v1789, 1.0
        %v1794 = vadd.f32 %v1790, 1.0
        %v1795 = vadd.f32 %v1791, 1.0
        %v1796 = vadd.f32 %v1792, 1.0
        %v1797 = vmul.f32 %v1793, 0.5
        %v1798 = vmul.f32 %v1794, 0.5
        %v1799 = vmul.f32 %v1795, 0.5
        %v1800 = vmul.f32 %v1796, 0.5
        %v1801 = vmul.f32 %v1755, %v1797
        %v1802 = vmul.f32 %v1758, %v1798
        %v1803 = vmul.f32 %v1763, %v1799
        %v1804 = vmul.f32 %v1766, %v1800
        %v1805 = vpack.c.bf16 %v1802, %v1801
        %v1806 = vpack.c.bf16 %v1804, %v1803
        %v1807 = vld [vmem:[%s732] sm:$0xf]
        %v1808 = vld [vmem:[%s732 + $0x4] sm:$0xf]
        %v1809 = vld [vmem:[%s732 + $0x8] sm:$0xf]
        %v1810 = vld [vmem:[%s732 + $0xc] sm:$0xf]
        %v1811 = vld [vmem:[%s732 + $0x10] sm:$0xf]
        %v1812 = vld [vmem:[%s732 + $0x14] sm:$0xf]
        %v1813 = vld [vmem:[%s732 + $0x18] sm:$0xf]
        %v1814 = vld [vmem:[%s732 + $0x1c] sm:$0xf]
        %v1815 = vld [vmem:[%s732 + $0x20] sm:$0xf]
        %v1816 = vld [vmem:[%s732 + $0x24] sm:$0xf]
        %v1817 = vld [vmem:[%s732 + $0x28] sm:$0xf]
        %v1818 = vld [vmem:[%s732 + $0x2c] sm:$0xf]
        %v1819 = vld [vmem:[%s732 + $0x30] sm:$0xf]
        %v1820 = vld [vmem:[%s732 + $0x34] sm:$0xf]
        %v1821 = vld [vmem:[%s732 + $0x38] sm:$0xf]
        %v1822 = vld [vmem:[%s732 + $0x3c] sm:$0xf]
        %v1823 = vlaneseq
        %v1824 = vshrl.u32 %v1823, 7
        %v1825 = vsub.s32 6, %v1824
        %v1826 = vrot.slane %v868, %v1825
        %v1843 = vunpack.c.l.b16 %v1807
        %v1844 = vunpack.c.l.b16 %v1808
        %v1845 = vunpack.c.l.b16 %v1809
        %v1846 = vunpack.c.l.b16 %v1810
        %v1847 = vunpack.c.l.b16 %v1811
        %v1848 = vunpack.c.l.b16 %v1812
        %v1849 = vunpack.c.l.b16 %v1813
        %v1850 = vunpack.c.l.b16 %v1814
        %v1851 = vunpack.c.l.b16 %v1815
        %v1852 = vunpack.c.l.b16 %v1816
        %v1853 = vunpack.c.l.b16 %v1817
        %v1854 = vunpack.c.l.b16 %v1818
        %v1855 = vunpack.c.l.b16 %v1819
        %v1856 = vunpack.c.l.b16 %v1820
        %v1857 = vunpack.c.l.b16 %v1821
        %v1858 = vunpack.c.l.b16 %v1822
        %v1859 = vpack.c.b16 %v1844, %v1843
        %v1860 = vpack.c.b16 %v1846, %v1845
        %v1861 = vpack.c.b16 %v1848, %v1847
        %v1862 = vpack.c.b16 %v1850, %v1849
        %v1863 = vpack.c.b16 %v1852, %v1851
        %v1864 = vpack.c.b16 %v1854, %v1853
        %v1865 = vpack.c.b16 %v1856, %v1855
        %v1866 = vpack.c.b16 %v1858, %v1857
        %1875 = vmatprep.subr.bf16.mxu0 0
        %1876 = vmatpush1.bf16.msra.mxu0 %v1866
        %1877 = vmatprep.subr.bf16.mxu0 0
        %1878 = vmatpush1.bf16.msra.mxu0 %v1865
        %1879 = vmatprep.subr.bf16.mxu0 0
        %1880 = vmatpush1.bf16.msra.mxu0 %v1864
        %1881 = vmatprep.subr.bf16.mxu0 0
        %1882 = vmatpush1.bf16.msra.mxu0 %v1863
        %1883 = vmatprep.subr.bf16.mxu0 0
        %1884 = vmatpush1.bf16.msra.mxu0 %v1862
        %1885 = vmatprep.subr.bf16.mxu0 0
        %1886 = vmatpush1.bf16.msra.mxu0 %v1861
        %1887 = vmatprep.subr.bf16.mxu0 0
        %1888 = vmatpush1.bf16.msra.mxu0 %v1860
        %1889 = vmatprep.subr.bf16.mxu0 0
        %1890 = vmatpush1.bf16.msra.mxu0 %v1859
        %1891 = vmatprep.subr.bf16.mxu0 0
        %1892 = vmatpush2.bf16.msra.mxu0 0
        %1893 = vmatprep.subr.bf16.mxu0 0
        %1894 = vmatpush2.bf16.msra.mxu0 0
        %1895 = vmatprep.subr.bf16.mxu0 0
        %1896 = vmatpush2.bf16.msra.mxu0 0
        %1897 = vmatprep.subr.bf16.mxu0 0
        %1898 = vmatpush2.bf16.msra.mxu0 0
        %1899 = vmatprep.subr.bf16.mxu0 0
        %1900 = vmatpush2.bf16.msra.mxu0 0
        %1901 = vmatprep.subr.bf16.mxu0 0
        %1902 = vmatpush2.bf16.msra.mxu0 0
        %1903 = vmatprep.subr.bf16.mxu0 0
        %1904 = vmatpush2.bf16.msra.mxu0 0
        %1905 = vmatprep.subr.bf16.mxu0 0
        %1906 = vmatpush2.bf16.msra.mxu0 0
        %1907 = vmatprep.mubr.bf16.mxu0 0
        %1908 = vmatmul.mubr.bf16.gmra.mxu0 %v1805
        %v1909 = vpop.f32.mrf.mxu0
        %v1910 = vadd.f32 %v1826, %v1909
        %v1911 = vpop.f32.mrf.mxu0
        %v1912 = vpop.f32.mrf.mxu0
        %v1913 = vadd.f32 %v1826, %v1912
        %v1914 = vpop.f32.mrf.mxu0
        %1915 = vmatprep.mubr.bf16.mxu0 0
        %1916 = vmatmul.mubr.bf16.gmra.mxu0 %v1806
        %v1917 = vpop.f32.mrf.mxu0
        %v1918 = vadd.f32 %v1826, %v1917
        %v1919 = vpop.f32.mrf.mxu0
        %v1920 = vpop.f32.mrf.mxu0
        %v1921 = vadd.f32 %v1826, %v1920
        %v1922 = vpop.f32.mrf.mxu0
        %1923 = vdwg.mxu0
        %v1924 = vlaneseq
        %v1925 = vshrl.u32 %v1924, 7
        %v1926 = vsub.s32 7, %v1925
        %v1927 = vrot.slane %v868, %v1926
        %v1928 = vmul.f32 %v1927, %v1910
        %v1929 = vmul.f32 %v1927, %v1913
        %v1930 = vmul.f32 %v1927, %v1918
        %v1931 = vmul.f32 %v1927, %v1921
        %v1932 = vpack.c.bf16 %v1929, %v1928
        %v1933 = vpack.c.bf16 %v1931, %v1930
        %v1934 = vld [vmem:[%s11] sm:$0xf]
        %v1935 = vld [vmem:[%s11 + $0x4] sm:$0xf]
        %v1936 = vld [vmem:[%s11 + $0x8] sm:$0xf]
        %v1937 = vld [vmem:[%s11 + $0xc] sm:$0xf]
        %v1938 = vld [vmem:[%s12] sm:$0x1]
        %v1940 = vlaneseq
        %v1941 = vshrl.u32 %v1940, 7
        %v1942 = vsub.s32 0, %v1941
        %v1943 = vrot.slane %v1938, %v1942
        %v1949 = vunpack.c.l.b16 %v1934
        %v1950 = vunpack.c.l.b16 %v1935
        %v1951 = vunpack.c.l.b16 %v1936
        %v1952 = vunpack.c.l.b16 %v1937
        %v1953 = vpack.c.b16 %v1950, %v1949
        %v1954 = vpack.c.b16 %v1952, %v1951
        %v1958 = vsel %vm869, %v1932, 0
        %v1961 = vsel %vm869, %v1933, 0
        %1963 = vmatprep.subr.bf16.mxu0 0
        %1964 = vmatpush1.bf16.msra.mxu0 0
        %1965 = vmatprep.subr.bf16.mxu0 0
        %1966 = vmatpush1.bf16.msra.mxu0 0
        %1967 = vmatprep.subr.bf16.mxu0 0
        %1968 = vmatpush1.bf16.msra.mxu0 0
        %1969 = vmatprep.subr.bf16.mxu0 0
        %1970 = vmatpush1.bf16.msra.mxu0 0
        %1971 = vmatprep.subr.bf16.mxu0 0
        %1972 = vmatpush1.bf16.msra.mxu0 0
        %1973 = vmatprep.subr.bf16.mxu0 0
        %1974 = vmatpush1.bf16.msra.mxu0 0
        %1975 = vmatprep.subr.bf16.mxu0 0
        %1976 = vmatpush1.bf16.msra.mxu0 %v1954
        %1977 = vmatprep.subr.bf16.mxu0 0
        %1978 = vmatpush1.bf16.msra.mxu0 %v1953
        %1979 = vmatprep.subr.bf16.mxu0 0
        %1980 = vmatpush2.bf16.msra.mxu0 0
        %1981 = vmatprep.subr.bf16.mxu0 0
        %1982 = vmatpush2.bf16.msra.mxu0 0
        %1983 = vmatprep.subr.bf16.mxu0 0
        %1984 = vmatpush2.bf16.msra.mxu0 0
        %1985 = vmatprep.subr.bf16.mxu0 0
        %1986 = vmatpush2.bf16.msra.mxu0 0
        %1987 = vmatprep.subr.bf16.mxu0 0
        %1988 = vmatpush2.bf16.msra.mxu0 0
        %1989 = vmatprep.subr.bf16.mxu0 0
        %1990 = vmatpush2.bf16.msra.mxu0 0
        %1991 = vmatprep.subr.bf16.mxu0 0
        %1992 = vmatpush2.bf16.msra.mxu0 0
        %1993 = vmatprep.subr.bf16.mxu0 0
        %1994 = vmatpush2.bf16.msra.mxu0 0
        %1995 = vmatprep.mubr.bf16.mxu0 0
        %1996 = vmatmul.mubr.bf16.gmra.mxu0 %v1958
        %v1997 = vpop.f32.mrf.mxu0
        %v1998 = vadd.f32 %v1943, %v1997
        %v1999 = vpop.f32.mrf.mxu0
        %v2000 = vpop.f32.mrf.mxu0
        %v2001 = vadd.f32 %v1943, %v2000
        %v2002 = vpop.f32.mrf.mxu0
        %2003 = vmatprep.mubr.bf16.mxu0 0
        %2004 = vmatmul.mubr.bf16.gmra.mxu0 %v1961
        %v2005 = vpop.f32.mrf.mxu0
        %v2006 = vadd.f32 %v1943, %v2005
        %v2007 = vpop.f32.mrf.mxu0
        %v2008 = vpop.f32.mrf.mxu0
        %v2009 = vadd.f32 %v1943, %v2008
        %v2010 = vpop.f32.mrf.mxu0
        %2011 = vdwg.mxu0
        %v2012 = vmul.f32 %v1998, %v1998
        %v2013 = vmul.f32 %v2001, %v2001
        %v2014 = vmul.f32 %v2006, %v2006
        %v2015 = vmul.f32 %v2009, %v2009
        %v2016 = vmul.f32 %v1998, %v2012
        %v2017 = vmul.f32 %v2001, %v2013
        %v2018 = vmul.f32 %v2006, %v2014
        %v2019 = vmul.f32 %v2009, %v2015
        %v2020 = vmul.f32 %v2016, 0.044715
        %v2021 = vmul.f32 %v2017, 0.044715
        %v2022 = vmul.f32 %v2018, 0.044715
        %v2023 = vmul.f32 %v2019, 0.044715
        %v2024 = vadd.f32 %v1998, %v2020
        %v2025 = vadd.f32 %v2001, %v2021
        %v2026 = vadd.f32 %v2006, %v2022
        %v2027 = vadd.f32 %v2009, %v2023
        %v2028 = vmul.f32 %v2024, 0.7978846
        %v2029 = vmul.f32 %v2025, 0.7978846
        %v2030 = vmul.f32 %v2026, 0.7978846
        %v2031 = vmul.f32 %v2027, 0.7978846
        %v2032 = vtanh.pop %v2028
        %v2033 = vtanh.pop %v2029
        %v2034 = vtanh.pop %v2030
        %v2035 = vtanh.pop %v2031
        %v2036 = vadd.f32 %v2032, 1.0
        %v2037 = vadd.f32 %v2033, 1.0
        %v2038 = vadd.f32 %v2034, 1.0
        %v2039 = vadd.f32 %v2035, 1.0
        %v2040 = vmul.f32 %v2036, 0.5
        %v2041 = vmul.f32 %v2037, 0.5
        %v2042 = vmul.f32 %v2038, 0.5
        %v2043 = vmul.f32 %v2039, 0.5
        %v2044 = vmul.f32 %v1998, %v2040
        %v2045 = vmul.f32 %v2001, %v2041
        %v2046 = vmul.f32 %v2006, %v2042
        %v2047 = vmul.f32 %v2009, %v2043
        %v2048 = vpack.c.bf16 %v2045, %v2044
        %v2049 = vpack.c.bf16 %v2047, %v2046
        %v2050 = vld [vmem:[%s13] sm:$0x3]
        %v2051 = vld [vmem:[%s14] sm:$0x1]
        %v2053 = vlaneseq
        %v2054 = vshrl.u32 %v2053, 7
        %v2055 = vsub.s32 0, %v2054
        %v2056 = vrot.slane %v2051, %v2055
        %vm2058 = vcmask 31744
        %v2060 = vsel %vm2058, %v2048, 0
        %v2063 = vsel %vm2058, %v2049, 0
        %vm2065 = vcmask 1041408
        %v2067 = vsel %vm2065, %v2050, 0
        %2069 = vmatprep.subr.bf16.mxu0 0
        %2070 = vmatpush1.bf16.msra.mxu0 0
        %2071 = vmatprep.subr.bf16.mxu0 0
        %2072 = vmatpush1.bf16.msra.mxu0 0
        %2073 = vmatprep.subr.bf16.mxu0 0
        %2074 = vmatpush1.bf16.msra.mxu0 0
        %2075 = vmatprep.subr.bf16.mxu0 0
        %2076 = vmatpush1.bf16.msra.mxu0 0
        %2077 = vmatprep.subr.bf16.mxu0 0
        %2078 = vmatpush1.bf16.msra.mxu0 0
        %2079 = vmatprep.subr.bf16.mxu0 0
        %2080 = vmatpush1.bf16.msra.mxu0 0
        %2081 = vmatprep.subr.bf16.mxu0 0
        %2082 = vmatpush1.bf16.msra.mxu0 0
        %2083 = vmatprep.subr.bf16.mxu0 0
        %2084 = vmatpush1.bf16.msra.mxu0 %v2067
        %2085 = vmatprep.subr.bf16.mxu0 0
        %2086 = vmatpush2.bf16.msra.mxu0 0
        %2087 = vmatprep.subr.bf16.mxu0 0
        %2088 = vmatpush2.bf16.msra.mxu0 0
        %2089 = vmatprep.subr.bf16.mxu0 0
        %2090 = vmatpush2.bf16.msra.mxu0 0
        %2091 = vmatprep.subr.bf16.mxu0 0
        %2092 = vmatpush2.bf16.msra.mxu0 0
        %2093 = vmatprep.subr.bf16.mxu0 0
        %2094 = vmatpush2.bf16.msra.mxu0 0
        %2095 = vmatprep.subr.bf16.mxu0 0
        %2096 = vmatpush2.bf16.msra.mxu0 0
        %2097 = vmatprep.subr.bf16.mxu0 0
        %2098 = vmatpush2.bf16.msra.mxu0 0
        %2099 = vmatprep.subr.bf16.mxu0 0
        %2100 = vmatpush2.bf16.msra.mxu0 0
        %2101 = vmatprep.mubr.bf16.mxu0 0
        %2102 = vmatmul.mubr.bf16.gmra.mxu0 %v2060
        %v2103 = vpop.f32.mrf.mxu0
        %v2104 = vadd.f32 %v2056, %v2103
        %v2105 = vpop.f32.mrf.mxu0
        %v2106 = vpop.f32.mrf.mxu0
        %v2107 = vadd.f32 %v2056, %v2106
        %v2108 = vpop.f32.mrf.mxu0
        %2109 = vmatprep.mubr.bf16.mxu0 0
        %2110 = vmatmul.mubr.bf16.gmra.mxu0 %v2063
        %v2111 = vpop.f32.mrf.mxu0
        %v2112 = vadd.f32 %v2056, %v2111
        %v2113 = vpop.f32.mrf.mxu0
        %v2114 = vpop.f32.mrf.mxu0
        %v2115 = vadd.f32 %v2056, %v2114
        %v2116 = vpop.f32.mrf.mxu0
        %2117 = vdwg.mxu0
        %v2118 = vadd.f32 %v2104, %v1928
        %v2119 = vadd.f32 %v2107, %v1929
        %v2120 = vadd.f32 %v2112, %v1930
        %v2121 = vadd.f32 %v2115, %v1931
        %v2122 = vadd.f32 %v2118, %v1617
        %v2123 = vadd.f32 %v2119, %v1618
        %v2124 = vadd.f32 %v2120, %v1619
        %v2125 = vadd.f32 %v2121, %v1620
        %2126 = vst.msk [vmem:[#allocation2] sm:$0xff] %vm869, %v2122
        %2127 = vst.msk [vmem:[#allocation2 + $0x8] sm:$0xff] %vm869, %v2123
        %2128 = vst.msk [vmem:[#allocation2 + $0x10] sm:$0xff] %vm869, %v2124
        %2129 = vst.msk [vmem:[#allocation2 + $0x18] sm:$0xff] %vm869, %v2125
        %p2130 = scmp.eq.s32.totalorder %s36, 1
        // Predicated region
        $region101: #{tpu_custom_call.1} parent=95 // pred_check
          %p2131 = pneg %p2130
        $region102: #{tpu_custom_call.1} parent=95 // pred_check_branch
          %2133 = sbr.rel (%p2131) target = $region104
        $region103: #{tpu_custom_call.1} parent=95 // pred_region
          %v2134 = vld [vmem:[%s15] sm:$0x1]
          %v2135 = vld [vmem:[%s16] sm:$0x1]
          %v2136 = vsel %vm869, %v2122, 0.0
          %2137 = vadd.xlane.f32.xlu0 %v2136
          %v2138 = vpop.xlane.xlu0 %2137
          %v2139 = vsel %vm869, %v2123, 0.0
          %2140 = vadd.xlane.f32.xlu0 %v2139
          %v2141 = vpop.xlane.xlu0 %2140
          %v2142 = vsel %vm869, %v2124, 0.0
          %2143 = vadd.xlane.f32.xlu0 %v2142
          %v2144 = vpop.xlane.xlu0 %2143
          %v2145 = vsel %vm869, %v2125, 0.0
          %2146 = vadd.xlane.f32.xlu0 %v2145
          %v2147 = vpop.xlane.xlu0 %2146
          %v2148 = vmul.f32 %v2138, %v882
          %v2149 = vmul.f32 %v2141, %v882
          %v2150 = vmul.f32 %v2144, %v882
          %v2151 = vmul.f32 %v2147, %v882
          %v2152 = vsub.f32 %v2122, %v2148
          %v2153 = vsub.f32 %v2123, %v2149
          %v2154 = vsub.f32 %v2124, %v2150
          %v2155 = vsub.f32 %v2125, %v2151
          %v2156 = vmul.f32 %v2152, %v2152
          %v2157 = vmul.f32 %v2153, %v2153
          %v2158 = vmul.f32 %v2154, %v2154
          %v2159 = vmul.f32 %v2155, %v2155
          %v2160 = vsel %vm869, %v2156, 0.0
          %2161 = vadd.xlane.f32.xlu0 %v2160
          %v2162 = vpop.xlane.xlu0 %2161
          %v2163 = vsel %vm869, %v2157, 0.0
          %2164 = vadd.xlane.f32.xlu0 %v2163
          %v2165 = vpop.xlane.xlu0 %2164
          %v2166 = vsel %vm869, %v2158, 0.0
          %2167 = vadd.xlane.f32.xlu0 %v2166
          %v2168 = vpop.xlane.xlu0 %2167
          %v2169 = vsel %vm869, %v2159, 0.0
          %2170 = vadd.xlane.f32.xlu0 %v2169
          %v2171 = vpop.xlane.xlu0 %2170
          %v2172 = vmul.f32 %v2162, %v882
          %v2173 = vmul.f32 %v2165, %v882
          %v2174 = vmul.f32 %v2168, %v882
          %v2175 = vmul.f32 %v2171, %v882
          %v2176 = vadd.f32 %v2172, 1e-06
          %v2177 = vadd.f32 %v2173, 1e-06
          %v2178 = vadd.f32 %v2174, 1e-06
          %v2179 = vadd.f32 %v2175, 1e-06
          %v2180 = vrsqrt.pop %v2176
          %v2181 = vrsqrt.pop %v2177
          %v2182 = vrsqrt.pop %v2178
          %v2183 = vrsqrt.pop %v2179
          %v2184 = vmul.f32 %v2152, %v2180
          %v2185 = vmul.f32 %v2153, %v2181
          %v2186 = vmul.f32 %v2154, %v2182
          %v2187 = vmul.f32 %v2155, %v2183
          %v2189 = vlaneseq
          %v2190 = vshrl.u32 %v2189, 7
          %v2191 = vsub.s32 0, %v2190
          %v2192 = vrot.slane %v2134, %v2191
          %v2194 = vmul.f32 %v2184, %v2192
          %v2195 = vmul.f32 %v2185, %v2192
          %v2196 = vmul.f32 %v2186, %v2192
          %v2197 = vmul.f32 %v2187, %v2192
          %v2199 = vlaneseq
          %v2200 = vshrl.u32 %v2199, 7
          %v2201 = vsub.s32 0, %v2200
          %v2202 = vrot.slane %v2135, %v2201
          %v2204 = vadd.f32 %v2194, %v2202
          %v2205 = vadd.f32 %v2195, %v2202
          %v2206 = vadd.f32 %v2196, %v2202
          %v2207 = vadd.f32 %v2197, %v2202
          %v2208 = vsel %vm869, %v2204, 0.0
          %v2209 = vsel %vm869, %v2205, 0.0
          %v2210 = vadd.f32 %v2208, %v2209
          %v2211 = vrot.slane %v2210, 4
          %v2212 = vadd.f32 %v2210, %v2211
          %v2213 = vrot.slane %v2212, 2
          %v2214 = vadd.f32 %v2212, %v2213
          %v2215 = vrot.slane %v2214, 1
          %v2216 = vadd.f32 %v2214, %v2215
          %v2217 = vsel %vm869, %v2206, 0.0
          %v2218 = vsel %vm869, %v2207, 0.0
          %v2219 = vadd.f32 %v2217, %v2218
          %v2220 = vrot.slane %v2219, 4
          %v2221 = vadd.f32 %v2219, %v2220
          %v2222 = vrot.slane %v2221, 2
          %v2223 = vadd.f32 %v2221, %v2222
          %v2224 = vrot.slane %v2223, 1
          %v2225 = vadd.f32 %v2223, %v2224
          %v2226 = vrcp.pop 16.0
          %v2227 = vmul.f32 %v2216, %v2226
          %v2228 = vmul.f32 %v2225, %v2226
          %v2229 = vld [vmem:[%s17] sm:$0xff]
          %v2230 = vld [vmem:[%s17 + $0x8] sm:$0xff]
          %v2231 = vld [vmem:[%s17 + $0x10] sm:$0xff]
          %v2232 = vld [vmem:[%s17 + $0x18] sm:$0xff]
          %v2233 = vld [vmem:[%s18] sm:$0x1]
          %v2235 = vlaneseq
          %v2236 = vshrl.u32 %v2235, 7
          %v2237 = vsub.s32 0, %v2236
          %v2238 = vrot.slane %v2233, %v2237
          %vm2242 = vcmask 1041409
          %v2243 = vsel %vm2242, %v2228, %v2227
          %v2244 = vsel %vm869, %v2243, 0
          %2246 = vmatprep.subr.mxu0 0.0
          %2247 = vmatpush1.msra.mxu0 0.0
          %2248 = vmatprep.subr.mxu0 0.0
          %2249 = vmatpush1.msra.mxu0 0.0
          %2250 = vmatprep.subr.mxu0 0.0
          %2251 = vmatpush1.msra.mxu0 0.0
          %2252 = vmatprep.subr.mxu0 0.0
          %2253 = vmatpush1.msra.mxu0 0.0
          %2254 = vmatprep.subr.mxu0 0.0
          %2255 = vmatpush1.msra.mxu0 0.0
          %2256 = vmatprep.subr.mxu0 0.0
          %2257 = vmatpush1.msra.mxu0 0.0
          %2258 = vmatprep.subr.mxu0 0.0
          %2259 = vmatpush1.msra.mxu0 0.0
          %2260 = vmatprep.subr.mxu0 0.0
          %2261 = vmatpush1.msra.mxu0 0.0
          %2262 = vmatprep.subr.mxu0 0.0
          %2263 = vmatpush1.msra.mxu0 0.0
          %2264 = vmatprep.subr.mxu0 0.0
          %2265 = vmatpush1.msra.mxu0 0.0
          %2266 = vmatprep.subr.mxu0 0.0
          %2267 = vmatpush1.msra.mxu0 0.0
          %2268 = vmatprep.subr.mxu0 0.0
          %2269 = vmatpush1.msra.mxu0 0.0
          %2270 = vmatprep.subr.mxu0 0.0
          %2271 = vmatpush1.msra.mxu0 %v2232
          %2272 = vmatprep.subr.mxu0 0.0
          %2273 = vmatpush1.msra.mxu0 %v2231
          %2274 = vmatprep.subr.mxu0 0.0
          %2275 = vmatpush1.msra.mxu0 %v2230
          %2276 = vmatprep.subr.mxu0 0.0
          %2277 = vmatpush1.msra.mxu0 %v2229
          %2278 = vmatprep.subr.mxu0 0.0
          %2279 = vmatpush2.msra.mxu0 0.0
          %2280 = vmatprep.subr.mxu0 0.0
          %2281 = vmatpush2.msra.mxu0 0.0
          %2282 = vmatprep.subr.mxu0 0.0
          %2283 = vmatpush2.msra.mxu0 0.0
          %2284 = vmatprep.subr.mxu0 0.0
          %2285 = vmatpush2.msra.mxu0 0.0
          %2286 = vmatprep.subr.mxu0 0.0
          %2287 = vmatpush2.msra.mxu0 0.0
          %2288 = vmatprep.subr.mxu0 0.0
          %2289 = vmatpush2.msra.mxu0 0.0
          %2290 = vmatprep.subr.mxu0 0.0
          %2291 = vmatpush2.msra.mxu0 0.0
          %2292 = vmatprep.subr.mxu0 0.0
          %2293 = vmatpush2.msra.mxu0 0.0
          %2294 = vmatprep.subr.mxu0 0.0
          %2295 = vmatpush2.msra.mxu0 0.0
          %2296 = vmatprep.subr.mxu0 0.0
          %2297 = vmatpush2.msra.mxu0 0.0
          %2298 = vmatprep.subr.mxu0 0.0
          %2299 = vmatpush2.msra.mxu0 0.0
          %2300 = vmatprep.subr.mxu0 0.0
          %2301 = vmatpush2.msra.mxu0 0.0
          %2302 = vmatprep.subr.mxu0 0.0
          %2303 = vmatpush2.msra.mxu0 0.0
          %2304 = vmatprep.subr.mxu0 0.0
          %2305 = vmatpush2.msra.mxu0 0.0
          %2306 = vmatprep.subr.mxu0 0.0
          %2307 = vmatpush2.msra.mxu0 0.0
          %2308 = vmatprep.subr.mxu0 0.0
          %2309 = vmatpush2.msra.mxu0 0.0
          %2310 = vmatprep.mubr.f32.mxu0 0.0
          %2311 = vmatmul.mubr.f32.gmra.mxu0 %v2244
          %v2312 = vpop.f32.mrf.mxu0
          %v2313 = vadd.f32 %v2238, %v2312
          %v2314 = vpop.f32.mrf.mxu0
          %2315 = vdwg.mxu0
          %vm2316 = vcmask 74752
          %2317 = vst.msk [vmem:[#allocation3] sm:$0x3] %vm2316, %v2313
        $region104: #{tpu_custom_call.1} parent=95 // pred_fallthru
          _
        // Predicated region
        $region105: #{tpu_custom_call.1} parent=95 // pred_check
          %p2318 = pneg %p500
        $region106: #{tpu_custom_call.1} parent=95 // pred_check_branch
          %2320 = sbr.rel (%p2318) target = $region108
        $region107: #{tpu_custom_call.1} parent=95 // pred_region
          %s2322 = ssub.s32 32, 32
          %2323 = vsyncadd [#allocation4], %s2322
          %s2324 = smul.addr %s35, 32
          %s2325 = scalar_lea.hbm %s19, %s2324
          %s2327 = sshll.u32 [#allocation3], 4
          %s2328 = int_to_ptr.vmem [resolvable:$true] %s2327
          %2330 = dma.vmem_to_hbm [thread:$0]  %s2328, 32, %s2325, [#allocation4]
        $region108: #{tpu_custom_call.1} parent=95 // pred_fallthru
          _
        // Predicated region
        $region109: #{tpu_custom_call.1} parent=95 // pred_check
          %p2331 = pneg %p500
        $region110: #{tpu_custom_call.1} parent=95 // pred_check_branch
          %2333 = sbr.rel (%p2331) target = $region112
        $region111: #{tpu_custom_call.1} parent=95 // pred_region
          %2334 = dma.done [#allocation4], 32
        $region112: #{tpu_custom_call.1} parent=95 // pred_fallthru
          _
      $region96: #{tpu_custom_call.1} parent=5 // pred_fallthru
        _
      %p2335 = scmp.le.s32.totalorder 2, %s26
      // Predicated region
      $region113: #{tpu_custom_call.1} parent=5 // pred_check
        %p2336 = pneg %p2335
      $region114: #{tpu_custom_call.1} parent=5 // pred_check_branch
        %2338 = sbr.rel (%p2336) target = $region116
      $region115: #{tpu_custom_call.1} parent=5 // pred_region
        %s2339 = ssub.s32 %s26, 2
      $region116: #{tpu_custom_call.1} parent=5 // pred_fallthru
        _
    $region6: #{tpu_custom_call.1} parent=1 // loop_footer
      %s30 = sadd.s32 1, %s26
    $region7: #{tpu_custom_call.1} parent=1 // loop_footer_branch
      %25 = sbr.rel target = $region3
    $region8: #{tpu_custom_call.1} parent=1 // loop_exit
      _
    %2340 = vsyncpa [#allocation4], 1
    %s2341 = scalar_lea.sflag [#allocation4], 1
    %2342 = vsyncpa %s2341, 1

</llo_original>
